<compile_context>
chip_gen: v7x
topology: tpu7x:2x2x1
jax: 0.10.0
libtpu: 0.0.40
codegen_flags: <defaults>
</compile_context>

<pallas_src>
import functools
from dataclasses import dataclass

import jax
import jax.numpy as jnp
from jax.experimental import pallas as pl
from jax.experimental.pallas import tpu as pltpu


# ---------------------------------------------------------------------------
# Hyper-parameters (mirrors the `params` object of the PyTorch module)
# ---------------------------------------------------------------------------
@dataclass(frozen=True)          # frozen => hashable => usable as a jit static arg
class Params:
    latent_variable_size: int = 16
    word_embed_size: int = 16
    decode_rnn_size: int = 32
    decode_num_layer: int = 2
    vocab_size: int = 64


_VMEM = pl.BlockSpec(memory_space=pltpu.MemorySpace.VMEM)


def _sigmoid(v):
    return 1.0 / (1.0 + jnp.exp(-v))


# ---------------------------------------------------------------------------
# Fused decoder kernel (all LSTM layers + FC in one pallas_call)
# ---------------------------------------------------------------------------
def make_decoder_kernel(num_layers: int):
    L = num_layers

    def kernel(*refs):
        it = iter(refs)
        # ---- inputs -------------------------------------------------------
        x_ref = next(it)       # (S*B, Dx)  time-major flattened word embeddings
        z_ref = next(it)       # (B, Dz)    latent variable
        h0_ref = next(it)      # (L, B, H)  initial hidden state
        c0_ref = next(it)      # (L, B, H)  initial cell state
        wx0_ref = next(it)     # (Dx, 4H)   layer-0 W_ih (word part), transposed
        wz0_ref = next(it)     # (Dz, 4H)   layer-0 W_ih (latent part), transposed
        whh0_ref = next(it)    # (H, 4H)
        b0_ref = next(it)      # (1, 4H)    b_ih + b_hh
        hidden = [(next(it), next(it), next(it)) for _ in range(L - 1)]  # (wih, whh, b)
        wfc_ref = next(it)     # (H, Vp)    FC weight, transposed & lane-padded
        bfc_ref = next(it)     # (1, Vp)
        # ---- outputs ------------------------------------------------------
        logits_ref = next(it)  # (S*B, Vp)
        hn_ref = next(it)      # (L, B, H)
        cn_ref = next(it)      # (L, B, H)
        # ---- scratch ------------------------------------------------------
        y_scr = next(it)       # (S*B, H)   per-layer hidden sequence (VMEM)

        B = h0_ref.shape[1]
        H = h0_ref.shape[2]
        S = x_ref.shape[0] // B
        f32 = jnp.float32

        def run_layer(layer, gate_in_at, whh_ref):
            """Recurrence for one layer. gate_in_at(t) -> (B, 4H) precomputed
            input contribution (hoisted out of the serial chain)."""
            whh = whh_ref[...]
            h = h0_ref[layer]              # (B, H), kept in registers
            c = c0_ref[layer]
            for t in range(S):             # S is static -> fully unrolled
                g = gate_in_at(t) + jnp.dot(h, whh, preferred_element_type=f32)
                sg = _sigmoid(g)           # full-width activation, slice after
                tg = jnp.tanh(g)
                i_g = sg[:, 0 * H:1 * H]
                f_g = sg[:, 1 * H:2 * H]
                g_g = tg[:, 2 * H:3 * H]
                o_g = sg[:, 3 * H:4 * H]
                c = f_g * c + i_g * g_g
                h = o_g * jnp.tanh(c)
                y_scr[t * B:(t + 1) * B, :] = h     # time-major rows t*B..t*B+B-1
            hn_ref[layer] = h
            cn_ref[layer] = c

        # ---- layer 0: hoisted input projection + z folded in once ----------
        gi0 = jnp.dot(x_ref[...], wx0_ref[...], preferred_element_type=f32)   # (S*B, 4H)
        zb = (jnp.dot(z_ref[...], wz0_ref[...], preferred_element_type=f32)
              + b0_ref[...])                                                  # (B, 4H)
        run_layer(0, lambda t: gi0[t * B:(t + 1) * B, :] + zb, whh0_ref)

        # ---- layers 1..L-1 --------------------------------------------------
        for l in range(1, L):
            wih_l, whh_l, b_l = hidden[l - 1]
            seq = y_scr[...]                                                  # (S*B, H)
            gil = (jnp.dot(seq, wih_l[...], preferred_element_type=f32)
                   + b_l[...])                                                # (S*B, 4H)
            run_layer(l, lambda t, g=gil: g[t * B:(t + 1) * B, :], whh_l)

        # ---- final FC over the last layer's whole sequence ------------------
        logits_ref[...] = (jnp.dot(y_scr[...], wfc_ref[...],
                                   preferred_element_type=f32) + bfc_ref[...])

    return kernel


# ---------------------------------------------------------------------------
# Parameter initialization (matches PyTorch weight shapes / gate order i,f,g,o)
# ---------------------------------------------------------------------------
def init_decoder_params(params: Params, key):
    H = params.decode_rnn_size
    in0 = params.latent_variable_size + params.word_embed_size
    bound = 1.0 / jnp.sqrt(H)
    weights = {"lstm": [], "fc": None}
    for layer in range(params.decode_num_layer):
        din = in0 if layer == 0 else H
        key, k1, k2, k3, k4 = jax.random.split(key, 5)
        w_ih = jax.random.uniform(k1, (4 * H, din), jnp.float32, -bound, bound)
        w_hh = jax.random.uniform(k2, (4 * H, H), jnp.float32, -bound, bound)
        b_ih = jax.random.uniform(k3, (4 * H,), jnp.float32, -bound, bound)
        b_hh = jax.random.uniform(k4, (4 * H,), jnp.float32, -bound, bound)
        weights["lstm"].append(
            dict(w_ih_t=w_ih.T,                       # (din, 4H)
                 w_hh_t=w_hh.T,                       # (H, 4H)
                 b2d=(b_ih + b_hh).reshape(1, 4 * H)))
    # FC (vocab) — lane-pad the output dim to a multiple of 128
    V = params.vocab_size
    Vp = ((V + 127) // 128) * 128
    key, k5, k6 = jax.random.split(key, 3)
    fb = 1.0 / jnp.sqrt(H)
    fc_w = jax.random.uniform(k5, (V, H), jnp.float32, -fb, fb)
    fc_b = jax.random.uniform(k6, (V,), jnp.float32, -fb, fb)
    w_t_pad = jnp.zeros((H, Vp), jnp.float32).at[:, :V].set(fc_w.T)
    b_pad = jnp.zeros((1, Vp), jnp.float32).at[:, :V].set(fc_b)
    weights["fc"] = dict(w_t_pad=w_t_pad, b_pad=b_pad)
    return weights


# ---------------------------------------------------------------------------
# Decoder forward pass (mirrors Decoder.forward)
# ---------------------------------------------------------------------------
@functools.partial(jax.jit, static_argnums=(0, 4, 6))
def decoder_forward(params: Params, weights, inp, z,
                    drop_prob=0.0, init_state=None, concat=True):
    B, S, E = inp.shape
    H = params.decode_rnn_size
    L = params.decode_num_layer
    V = params.vocab_size
    Dz = params.latent_variable_size

    # F.dropout with drop_prob=0.0 is the identity.
    # TODO(synk): in-kernel pltpu.prng-based dropout for drop_prob > 0.
    x = inp

    w0 = weights["lstm"][0]
    if concat:
        # Instead of concatenating [x, z_repeated] along features, split layer-0
        # W_ih: first E columns act on x, remaining Dz columns act on z (which is
        # constant over time, so its contribution is computed once per batch).
        wx0 = w0["w_ih_t"][:E, :]
        wz0 = w0["w_ih_t"][E:, :]
    else:
        wx0 = w0["w_ih_t"]
        wz0 = jnp.zeros((Dz, 4 * H), jnp.float32)

    if init_state is None:
        h0 = jnp.zeros((L, B, H), jnp.float32)
        c0 = jnp.zeros((L, B, H), jnp.float32)
    else:
        h0, c0 = init_state

    # time-major flattened input: row = t*B + b (tiny; fused XLA op)
    x_tm = jnp.transpose(x, (1, 0, 2)).reshape(S * B, E)

    flat_w = [wx0, wz0, w0["w_hh_t"], w0["b2d"]]
    for l in range(1, L):
        wl = weights["lstm"][l]
        flat_w += [wl["w_ih_t"], wl["w_hh_t"], wl["b2d"]]
    flat_w += [weights["fc"]["w_t_pad"], weights["fc"]["b_pad"]]
    Vp = weights["fc"]["w_t_pad"].shape[-1]

    out_shape = (jax.ShapeDtypeStruct((S * B, Vp), jnp.float32),
                 jax.ShapeDtypeStruct((L, B, H), jnp.float32),
                 jax.ShapeDtypeStruct((L, B, H), jnp.float32))

    logits2d, h_n, c_n = pl.pallas_call(
        make_decoder_kernel(L),
        out_shape=out_shape,
        in_specs=[_VMEM] * (4 + len(flat_w)),
        out_specs=(_VMEM, _VMEM, _VMEM),
        scratch_shapes=[pltpu.VMEM((S * B, H), jnp.float32)],
    )(x_tm, z, h0, c0, *flat_w)

    # (S*B, Vp) time-major -> (B, S, V) batch-first; tiny fused XLA ops.
    result = jnp.transpose(logits2d.reshape(S, B, Vp), (1, 0, 2))[:, :, :V]
    return result, (h_n, c_n)


# ---------------------------------------------------------------------------
if __name__ == "__main__":
    params = Params()
    key = jax.random.PRNGKey(0)
    key, k_w, k_x, k_z = jax.random.split(key, 4)

    weights = init_decoder_params(params, k_w)

    B, S = 2, 8
    inp = jax.random.normal(k_x, (B, S, params.word_embed_size), jnp.float32)
    z = jax.random.normal(k_z, (B, params.latent_variable_size), jnp.float32)

    result, (h_n, c_n) = decoder_forward(params, weights, inp, z, 0.0, None, True)
    jax.block_until_ready((result, h_n, c_n))

    assert result.shape == (B, S, params.vocab_size)
    assert h_n.shape == (params.decode_num_layer, B, params.decode_rnn_size)
    assert c_n.shape == (params.decode_num_layer, B, params.decode_rnn_size)
    assert bool(jnp.all(jnp.isfinite(result)))
    print("KERNEL_OK")
</pallas_src>

<mosaic_0001>
module attributes {stable_mosaic.version = 11 : i64} {
  func.func @kernel(%arg0: memref<16x16xf32, #tpu.memory_space<vmem>>, %arg1: memref<2x16xf32, #tpu.memory_space<vmem>>, %arg2: memref<2x2x32xf32, #tpu.memory_space<vmem>>, %arg3: memref<2x2x32xf32, #tpu.memory_space<vmem>>, %arg4: memref<16x128xf32, #tpu.memory_space<vmem>>, %arg5: memref<16x128xf32, #tpu.memory_space<vmem>>, %arg6: memref<32x128xf32, #tpu.memory_space<vmem>>, %arg7: memref<1x128xf32, #tpu.memory_space<vmem>>, %arg8: memref<32x128xf32, #tpu.memory_space<vmem>>, %arg9: memref<32x128xf32, #tpu.memory_space<vmem>>, %arg10: memref<1x128xf32, #tpu.memory_space<vmem>>, %arg11: memref<32x128xf32, #tpu.memory_space<vmem>>, %arg12: memref<1x128xf32, #tpu.memory_space<vmem>>, %arg13: memref<16x128xf32, #tpu.memory_space<vmem>>, %arg14: memref<2x2x32xf32, #tpu.memory_space<vmem>>, %arg15: memref<2x2x32xf32, #tpu.memory_space<vmem>>, %arg16: memref<16x32xf32, #tpu.memory_space<vmem>>) attributes {dimension_semantics = [], scalar_prefetch = 0 : i64, scratch_operands = 1 : i64, tpu.core_type = #tpu.core_type<tc>} {
    %c0 = arith.constant 0 : index
    %c0_0 = arith.constant 0 : index
    %0 = vector.load %arg0[%c0, %c0_0] : memref<16x16xf32, #tpu.memory_space<vmem>>, vector<16x16xf32>
    %c0_1 = arith.constant 0 : index
    %c0_2 = arith.constant 0 : index
    %1 = vector.load %arg4[%c0_1, %c0_2] : memref<16x128xf32, #tpu.memory_space<vmem>>, vector<16x128xf32>
    %cst = arith.constant dense<0.000000e+00> : vector<16x128xf32>
    %2 = tpu.matmul %0, %1, %cst {dimension_numbers = #tpu.dot_dimension_numbers<[1], [0], [0], [1], [0, 0, 1, 1], [], []>} : vector<16x16xf32>, vector<16x128xf32>, vector<16x128xf32> -> vector<16x128xf32>
    %c0_3 = arith.constant 0 : index
    %c0_4 = arith.constant 0 : index
    %3 = vector.load %arg1[%c0_3, %c0_4] : memref<2x16xf32, #tpu.memory_space<vmem>>, vector<2x16xf32>
    %c0_5 = arith.constant 0 : index
    %c0_6 = arith.constant 0 : index
    %4 = vector.load %arg5[%c0_5, %c0_6] : memref<16x128xf32, #tpu.memory_space<vmem>>, vector<16x128xf32>
    %cst_7 = arith.constant dense<0.000000e+00> : vector<2x128xf32>
    %5 = tpu.matmul %3, %4, %cst_7 {dimension_numbers = #tpu.dot_dimension_numbers<[1], [0], [0], [1], [0, 0, 1, 1], [], []>} : vector<2x16xf32>, vector<16x128xf32>, vector<2x128xf32> -> vector<2x128xf32>
    %c0_8 = arith.constant 0 : index
    %c0_9 = arith.constant 0 : index
    %6 = vector.load %arg7[%c0_8, %c0_9] : memref<1x128xf32, #tpu.memory_space<vmem>>, vector<1x128xf32>
    %7 = vector.broadcast %6 : vector<1x128xf32> to vector<2x128xf32>
    %8 = arith.addf %5, %7 : vector<2x128xf32>
    %c0_10 = arith.constant 0 : index
    %c0_11 = arith.constant 0 : index
    %9 = vector.load %arg6[%c0_10, %c0_11] : memref<32x128xf32, #tpu.memory_space<vmem>>, vector<32x128xf32>
    %c0_12 = arith.constant 0 : index
    %c0_13 = arith.constant 0 : index
    %c0_14 = arith.constant 0 : index
    %10 = vector.load %arg2[%c0_12, %c0_13, %c0_14] : memref<2x2x32xf32, #tpu.memory_space<vmem>>, vector<1x2x32xf32>
    %11 = vector.shape_cast %10 : vector<1x2x32xf32> to vector<2x32xf32>
    %c0_15 = arith.constant 0 : index
    %c0_16 = arith.constant 0 : index
    %c0_17 = arith.constant 0 : index
    %12 = vector.load %arg3[%c0_15, %c0_16, %c0_17] : memref<2x2x32xf32, #tpu.memory_space<vmem>>, vector<1x2x32xf32>
    %13 = vector.shape_cast %12 : vector<1x2x32xf32> to vector<2x32xf32>
    %14 = vector.extract_strided_slice %2 {offsets = [0, 0], sizes = [2, 128], strides = [1, 1]} : vector<16x128xf32> to vector<2x128xf32>
    %15 = arith.addf %14, %8 : vector<2x128xf32>
    %cst_18 = arith.constant dense<0.000000e+00> : vector<2x128xf32>
    %16 = tpu.matmul %11, %9, %cst_18 {dimension_numbers = #tpu.dot_dimension_numbers<[1], [0], [0], [1], [0, 0, 1, 1], [], []>} : vector<2x32xf32>, vector<32x128xf32>, vector<2x128xf32> -> vector<2x128xf32>
    %17 = arith.addf %15, %16 : vector<2x128xf32>
    %cst_19 = arith.constant 0.000000e+00 : f32
    %18 = vector.broadcast %cst_19 : f32 to vector<2x128xf32>
    %19 = arith.subf %18, %17 : vector<2x128xf32>
    %20 = math.exp %19 : vector<2x128xf32>
    %cst_20 = arith.constant 1.000000e+00 : f32
    %21 = vector.broadcast %cst_20 : f32 to vector<2x128xf32>
    %22 = arith.addf %21, %20 : vector<2x128xf32>
    %cst_21 = arith.constant 1.000000e+00 : f32
    %23 = vector.broadcast %cst_21 : f32 to vector<2x128xf32>
    %24 = arith.divf %23, %22 : vector<2x128xf32>
    %25 = math.tanh %17 : vector<2x128xf32>
    %26 = vector.extract_strided_slice %24 {offsets = [0, 0], sizes = [2, 32], strides = [1, 1]} : vector<2x128xf32> to vector<2x32xf32>
    %27 = vector.extract_strided_slice %24 {offsets = [0, 32], sizes = [2, 32], strides = [1, 1]} : vector<2x128xf32> to vector<2x32xf32>
    %28 = vector.extract_strided_slice %25 {offsets = [0, 64], sizes = [2, 32], strides = [1, 1]} : vector<2x128xf32> to vector<2x32xf32>
    %29 = vector.extract_strided_slice %24 {offsets = [0, 96], sizes = [2, 32], strides = [1, 1]} : vector<2x128xf32> to vector<2x32xf32>
    %30 = arith.mulf %27, %13 : vector<2x32xf32>
    %31 = arith.mulf %26, %28 : vector<2x32xf32>
    %32 = arith.addf %30, %31 : vector<2x32xf32>
    %33 = math.tanh %32 : vector<2x32xf32>
    %34 = arith.mulf %29, %33 : vector<2x32xf32>
    %c0_22 = arith.constant 0 : index
    %c0_23 = arith.constant 0 : index
    %35 = vector.load %arg16[%c0_22, %c0_23] : memref<16x32xf32, #tpu.memory_space<vmem>>, vector<2x32xf32>
    tpu.vector_store %arg16[%c0_22, %c0_23], %34 {strides = array<i32>} : memref<16x32xf32, #tpu.memory_space<vmem>>, vector<2x32xf32>,
    %36 = vector.extract_strided_slice %2 {offsets = [2, 0], sizes = [2, 128], strides = [1, 1]} : vector<16x128xf32> to vector<2x128xf32>
    %37 = arith.addf %36, %8 : vector<2x128xf32>
    %cst_24 = arith.constant dense<0.000000e+00> : vector<2x128xf32>
    %38 = tpu.matmul %34, %9, %cst_24 {dimension_numbers = #tpu.dot_dimension_numbers<[1], [0], [0], [1], [0, 0, 1, 1], [], []>} : vector<2x32xf32>, vector<32x128xf32>, vector<2x128xf32> -> vector<2x128xf32>
    %39 = arith.addf %37, %38 : vector<2x128xf32>
    %cst_25 = arith.constant 0.000000e+00 : f32
    %40 = vector.broadcast %cst_25 : f32 to vector<2x128xf32>
    %41 = arith.subf %40, %39 : vector<2x128xf32>
    %42 = math.exp %41 : vector<2x128xf32>
    %cst_26 = arith.constant 1.000000e+00 : f32
    %43 = vector.broadcast %cst_26 : f32 to vector<2x128xf32>
    %44 = arith.addf %43, %42 : vector<2x128xf32>
    %cst_27 = arith.constant 1.000000e+00 : f32
    %45 = vector.broadcast %cst_27 : f32 to vector<2x128xf32>
    %46 = arith.divf %45, %44 : vector<2x128xf32>
    %47 = math.tanh %39 : vector<2x128xf32>
    %48 = vector.extract_strided_slice %46 {offsets = [0, 0], sizes = [2, 32], strides = [1, 1]} : vector<2x128xf32> to vector<2x32xf32>
    %49 = vector.extract_strided_slice %46 {offsets = [0, 32], sizes = [2, 32], strides = [1, 1]} : vector<2x128xf32> to vector<2x32xf32>
    %50 = vector.extract_strided_slice %47 {offsets = [0, 64], sizes = [2, 32], strides = [1, 1]} : vector<2x128xf32> to vector<2x32xf32>
    %51 = vector.extract_strided_slice %46 {offsets = [0, 96], sizes = [2, 32], strides = [1, 1]} : vector<2x128xf32> to vector<2x32xf32>
    %52 = arith.mulf %49, %32 : vector<2x32xf32>
    %53 = arith.mulf %48, %50 : vector<2x32xf32>
    %54 = arith.addf %52, %53 : vector<2x32xf32>
    %55 = math.tanh %54 : vector<2x32xf32>
    %56 = arith.mulf %51, %55 : vector<2x32xf32>
    %c2 = arith.constant 2 : index
    %c0_28 = arith.constant 0 : index
    %57 = vector.load %arg16[%c2, %c0_28] : memref<16x32xf32, #tpu.memory_space<vmem>>, vector<2x32xf32>
    tpu.vector_store %arg16[%c2, %c0_28], %56 {strides = array<i32>} : memref<16x32xf32, #tpu.memory_space<vmem>>, vector<2x32xf32>,
    %58 = vector.extract_strided_slice %2 {offsets = [4, 0], sizes = [2, 128], strides = [1, 1]} : vector<16x128xf32> to vector<2x128xf32>
    %59 = arith.addf %58, %8 : vector<2x128xf32>
    %cst_29 = arith.constant dense<0.000000e+00> : vector<2x128xf32>
    %60 = tpu.matmul %56, %9, %cst_29 {dimension_numbers = #tpu.dot_dimension_numbers<[1], [0], [0], [1], [0, 0, 1, 1], [], []>} : vector<2x32xf32>, vector<32x128xf32>, vector<2x128xf32> -> vector<2x128xf32>
    %61 = arith.addf %59, %60 : vector<2x128xf32>
    %cst_30 = arith.constant 0.000000e+00 : f32
    %62 = vector.broadcast %cst_30 : f32 to vector<2x128xf32>
    %63 = arith.subf %62, %61 : vector<2x128xf32>
    %64 = math.exp %63 : vector<2x128xf32>
    %cst_31 = arith.constant 1.000000e+00 : f32
    %65 = vector.broadcast %cst_31 : f32 to vector<2x128xf32>
    %66 = arith.addf %65, %64 : vector<2x128xf32>
    %cst_32 = arith.constant 1.000000e+00 : f32
    %67 = vector.broadcast %cst_32 : f32 to vector<2x128xf32>
    %68 = arith.divf %67, %66 : vector<2x128xf32>
    %69 = math.tanh %61 : vector<2x128xf32>
    %70 = vector.extract_strided_slice %68 {offsets = [0, 0], sizes = [2, 32], strides = [1, 1]} : vector<2x128xf32> to vector<2x32xf32>
    %71 = vector.extract_strided_slice %68 {offsets = [0, 32], sizes = [2, 32], strides = [1, 1]} : vector<2x128xf32> to vector<2x32xf32>
    %72 = vector.extract_strided_slice %69 {offsets = [0, 64], sizes = [2, 32], strides = [1, 1]} : vector<2x128xf32> to vector<2x32xf32>
    %73 = vector.extract_strided_slice %68 {offsets = [0, 96], sizes = [2, 32], strides = [1, 1]} : vector<2x128xf32> to vector<2x32xf32>
    %74 = arith.mulf %71, %54 : vector<2x32xf32>
    %75 = arith.mulf %70, %72 : vector<2x32xf32>
    %76 = arith.addf %74, %75 : vector<2x32xf32>
    %77 = math.tanh %76 : vector<2x32xf32>
    %78 = arith.mulf %73, %77 : vector<2x32xf32>
    %c4 = arith.constant 4 : index
    %c0_33 = arith.constant 0 : index
    %79 = vector.load %arg16[%c4, %c0_33] : memref<16x32xf32, #tpu.memory_space<vmem>>, vector<2x32xf32>
    tpu.vector_store %arg16[%c4, %c0_33], %78 {strides = array<i32>} : memref<16x32xf32, #tpu.memory_space<vmem>>, vector<2x32xf32>,
    %80 = vector.extract_strided_slice %2 {offsets = [6, 0], sizes = [2, 128], strides = [1, 1]} : vector<16x128xf32> to vector<2x128xf32>
    %81 = arith.addf %80, %8 : vector<2x128xf32>
    %cst_34 = arith.constant dense<0.000000e+00> : vector<2x128xf32>
    %82 = tpu.matmul %78, %9, %cst_34 {dimension_numbers = #tpu.dot_dimension_numbers<[1], [0], [0], [1], [0, 0, 1, 1], [], []>} : vector<2x32xf32>, vector<32x128xf32>, vector<2x128xf32> -> vector<2x128xf32>
    %83 = arith.addf %81, %82 : vector<2x128xf32>
    %cst_35 = arith.constant 0.000000e+00 : f32
    %84 = vector.broadcast %cst_35 : f32 to vector<2x128xf32>
    %85 = arith.subf %84, %83 : vector<2x128xf32>
    %86 = math.exp %85 : vector<2x128xf32>
    %cst_36 = arith.constant 1.000000e+00 : f32
    %87 = vector.broadcast %cst_36 : f32 to vector<2x128xf32>
    %88 = arith.addf %87, %86 : vector<2x128xf32>
    %cst_37 = arith.constant 1.000000e+00 : f32
    %89 = vector.broadcast %cst_37 : f32 to vector<2x128xf32>
    %90 = arith.divf %89, %88 : vector<2x128xf32>
    %91 = math.tanh %83 : vector<2x128xf32>
    %92 = vector.extract_strided_slice %90 {offsets = [0, 0], sizes = [2, 32], strides = [1, 1]} : vector<2x128xf32> to vector<2x32xf32>
    %93 = vector.extract_strided_slice %90 {offsets = [0, 32], sizes = [2, 32], strides = [1, 1]} : vector<2x128xf32> to vector<2x32xf32>
    %94 = vector.extract_strided_slice %91 {offsets = [0, 64], sizes = [2, 32], strides = [1, 1]} : vector<2x128xf32> to vector<2x32xf32>
    %95 = vector.extract_strided_slice %90 {offsets = [0, 96], sizes = [2, 32], strides = [1, 1]} : vector<2x128xf32> to vector<2x32xf32>
    %96 = arith.mulf %93, %76 : vector<2x32xf32>
    %97 = arith.mulf %92, %94 : vector<2x32xf32>
    %98 = arith.addf %96, %97 : vector<2x32xf32>
    %99 = math.tanh %98 : vector<2x32xf32>
    %100 = arith.mulf %95, %99 : vector<2x32xf32>
    %c6 = arith.constant 6 : index
    %c0_38 = arith.constant 0 : index
    %101 = vector.load %arg16[%c6, %c0_38] : memref<16x32xf32, #tpu.memory_space<vmem>>, vector<2x32xf32>
    tpu.vector_store %arg16[%c6, %c0_38], %100 {strides = array<i32>} : memref<16x32xf32, #tpu.memory_space<vmem>>, vector<2x32xf32>,
    %102 = vector.extract_strided_slice %2 {offsets = [8, 0], sizes = [2, 128], strides = [1, 1]} : vector<16x128xf32> to vector<2x128xf32>
    %103 = arith.addf %102, %8 : vector<2x128xf32>
    %cst_39 = arith.constant dense<0.000000e+00> : vector<2x128xf32>
    %104 = tpu.matmul %100, %9, %cst_39 {dimension_numbers = #tpu.dot_dimension_numbers<[1], [0], [0], [1], [0, 0, 1, 1], [], []>} : vector<2x32xf32>, vector<32x128xf32>, vector<2x128xf32> -> vector<2x128xf32>
    %105 = arith.addf %103, %104 : vector<2x128xf32>
    %cst_40 = arith.constant 0.000000e+00 : f32
    %106 = vector.broadcast %cst_40 : f32 to vector<2x128xf32>
    %107 = arith.subf %106, %105 : vector<2x128xf32>
    %108 = math.exp %107 : vector<2x128xf32>
    %cst_41 = arith.constant 1.000000e+00 : f32
    %109 = vector.broadcast %cst_41 : f32 to vector<2x128xf32>
    %110 = arith.addf %109, %108 : vector<2x128xf32>
    %cst_42 = arith.constant 1.000000e+00 : f32
    %111 = vector.broadcast %cst_42 : f32 to vector<2x128xf32>
    %112 = arith.divf %111, %110 : vector<2x128xf32>
    %113 = math.tanh %105 : vector<2x128xf32>
    %114 = vector.extract_strided_slice %112 {offsets = [0, 0], sizes = [2, 32], strides = [1, 1]} : vector<2x128xf32> to vector<2x32xf32>
    %115 = vector.extract_strided_slice %112 {offsets = [0, 32], sizes = [2, 32], strides = [1, 1]} : vector<2x128xf32> to vector<2x32xf32>
    %116 = vector.extract_strided_slice %113 {offsets = [0, 64], sizes = [2, 32], strides = [1, 1]} : vector<2x128xf32> to vector<2x32xf32>
    %117 = vector.extract_strided_slice %112 {offsets = [0, 96], sizes = [2, 32], strides = [1, 1]} : vector<2x128xf32> to vector<2x32xf32>
    %118 = arith.mulf %115, %98 : vector<2x32xf32>
    %119 = arith.mulf %114, %116 : vector<2x32xf32>
    %120 = arith.addf %118, %119 : vector<2x32xf32>
    %121 = math.tanh %120 : vector<2x32xf32>
    %122 = arith.mulf %117, %121 : vector<2x32xf32>
    %c8 = arith.constant 8 : index
    %c0_43 = arith.constant 0 : index
    %123 = vector.load %arg16[%c8, %c0_43] : memref<16x32xf32, #tpu.memory_space<vmem>>, vector<2x32xf32>
    tpu.vector_store %arg16[%c8, %c0_43], %122 {strides = array<i32>} : memref<16x32xf32, #tpu.memory_space<vmem>>, vector<2x32xf32>,
    %124 = vector.extract_strided_slice %2 {offsets = [10, 0], sizes = [2, 128], strides = [1, 1]} : vector<16x128xf32> to vector<2x128xf32>
    %125 = arith.addf %124, %8 : vector<2x128xf32>
    %cst_44 = arith.constant dense<0.000000e+00> : vector<2x128xf32>
    %126 = tpu.matmul %122, %9, %cst_44 {dimension_numbers = #tpu.dot_dimension_numbers<[1], [0], [0], [1], [0, 0, 1, 1], [], []>} : vector<2x32xf32>, vector<32x128xf32>, vector<2x128xf32> -> vector<2x128xf32>
    %127 = arith.addf %125, %126 : vector<2x128xf32>
    %cst_45 = arith.constant 0.000000e+00 : f32
    %128 = vector.broadcast %cst_45 : f32 to vector<2x128xf32>
    %129 = arith.subf %128, %127 : vector<2x128xf32>
    %130 = math.exp %129 : vector<2x128xf32>
    %cst_46 = arith.constant 1.000000e+00 : f32
    %131 = vector.broadcast %cst_46 : f32 to vector<2x128xf32>
    %132 = arith.addf %131, %130 : vector<2x128xf32>
    %cst_47 = arith.constant 1.000000e+00 : f32
    %133 = vector.broadcast %cst_47 : f32 to vector<2x128xf32>
    %134 = arith.divf %133, %132 : vector<2x128xf32>
    %135 = math.tanh %127 : vector<2x128xf32>
    %136 = vector.extract_strided_slice %134 {offsets = [0, 0], sizes = [2, 32], strides = [1, 1]} : vector<2x128xf32> to vector<2x32xf32>
    %137 = vector.extract_strided_slice %134 {offsets = [0, 32], sizes = [2, 32], strides = [1, 1]} : vector<2x128xf32> to vector<2x32xf32>
    %138 = vector.extract_strided_slice %135 {offsets = [0, 64], sizes = [2, 32], strides = [1, 1]} : vector<2x128xf32> to vector<2x32xf32>
    %139 = vector.extract_strided_slice %134 {offsets = [0, 96], sizes = [2, 32], strides = [1, 1]} : vector<2x128xf32> to vector<2x32xf32>
    %140 = arith.mulf %137, %120 : vector<2x32xf32>
    %141 = arith.mulf %136, %138 : vector<2x32xf32>
    %142 = arith.addf %140, %141 : vector<2x32xf32>
    %143 = math.tanh %142 : vector<2x32xf32>
    %144 = arith.mulf %139, %143 : vector<2x32xf32>
    %c10 = arith.constant 10 : index
    %c0_48 = arith.constant 0 : index
    %145 = vector.load %arg16[%c10, %c0_48] : memref<16x32xf32, #tpu.memory_space<vmem>>, vector<2x32xf32>
    tpu.vector_store %arg16[%c10, %c0_48], %144 {strides = array<i32>} : memref<16x32xf32, #tpu.memory_space<vmem>>, vector<2x32xf32>,
    %146 = vector.extract_strided_slice %2 {offsets = [12, 0], sizes = [2, 128], strides = [1, 1]} : vector<16x128xf32> to vector<2x128xf32>
    %147 = arith.addf %146, %8 : vector<2x128xf32>
    %cst_49 = arith.constant dense<0.000000e+00> : vector<2x128xf32>
    %148 = tpu.matmul %144, %9, %cst_49 {dimension_numbers = #tpu.dot_dimension_numbers<[1], [0], [0], [1], [0, 0, 1, 1], [], []>} : vector<2x32xf32>, vector<32x128xf32>, vector<2x128xf32> -> vector<2x128xf32>
    %149 = arith.addf %147, %148 : vector<2x128xf32>
    %cst_50 = arith.constant 0.000000e+00 : f32
    %150 = vector.broadcast %cst_50 : f32 to vector<2x128xf32>
    %151 = arith.subf %150, %149 : vector<2x128xf32>
    %152 = math.exp %151 : vector<2x128xf32>
    %cst_51 = arith.constant 1.000000e+00 : f32
    %153 = vector.broadcast %cst_51 : f32 to vector<2x128xf32>
    %154 = arith.addf %153, %152 : vector<2x128xf32>
    %cst_52 = arith.constant 1.000000e+00 : f32
    %155 = vector.broadcast %cst_52 : f32 to vector<2x128xf32>
    %156 = arith.divf %155, %154 : vector<2x128xf32>
    %157 = math.tanh %149 : vector<2x128xf32>
    %158 = vector.extract_strided_slice %156 {offsets = [0, 0], sizes = [2, 32], strides = [1, 1]} : vector<2x128xf32> to vector<2x32xf32>
    %159 = vector.extract_strided_slice %156 {offsets = [0, 32], sizes = [2, 32], strides = [1, 1]} : vector<2x128xf32> to vector<2x32xf32>
    %160 = vector.extract_strided_slice %157 {offsets = [0, 64], sizes = [2, 32], strides = [1, 1]} : vector<2x128xf32> to vector<2x32xf32>
    %161 = vector.extract_strided_slice %156 {offsets = [0, 96], sizes = [2, 32], strides = [1, 1]} : vector<2x128xf32> to vector<2x32xf32>
    %162 = arith.mulf %159, %142 : vector<2x32xf32>
    %163 = arith.mulf %158, %160 : vector<2x32xf32>
    %164 = arith.addf %162, %163 : vector<2x32xf32>
    %165 = math.tanh %164 : vector<2x32xf32>
    %166 = arith.mulf %161, %165 : vector<2x32xf32>
    %c12 = arith.constant 12 : index
    %c0_53 = arith.constant 0 : index
    %167 = vector.load %arg16[%c12, %c0_53] : memref<16x32xf32, #tpu.memory_space<vmem>>, vector<2x32xf32>
    tpu.vector_store %arg16[%c12, %c0_53], %166 {strides = array<i32>} : memref<16x32xf32, #tpu.memory_space<vmem>>, vector<2x32xf32>,
    %168 = vector.extract_strided_slice %2 {offsets = [14, 0], sizes = [2, 128], strides = [1, 1]} : vector<16x128xf32> to vector<2x128xf32>
    %169 = arith.addf %168, %8 : vector<2x128xf32>
    %cst_54 = arith.constant dense<0.000000e+00> : vector<2x128xf32>
    %170 = tpu.matmul %166, %9, %cst_54 {dimension_numbers = #tpu.dot_dimension_numbers<[1], [0], [0], [1], [0, 0, 1, 1], [], []>} : vector<2x32xf32>, vector<32x128xf32>, vector<2x128xf32> -> vector<2x128xf32>
    %171 = arith.addf %169, %170 : vector<2x128xf32>
    %cst_55 = arith.constant 0.000000e+00 : f32
    %172 = vector.broadcast %cst_55 : f32 to vector<2x128xf32>
    %173 = arith.subf %172, %171 : vector<2x128xf32>
    %174 = math.exp %173 : vector<2x128xf32>
    %cst_56 = arith.constant 1.000000e+00 : f32
    %175 = vector.broadcast %cst_56 : f32 to vector<2x128xf32>
    %176 = arith.addf %175, %174 : vector<2x128xf32>
    %cst_57 = arith.constant 1.000000e+00 : f32
    %177 = vector.broadcast %cst_57 : f32 to vector<2x128xf32>
    %178 = arith.divf %177, %176 : vector<2x128xf32>
    %179 = math.tanh %171 : vector<2x128xf32>
    %180 = vector.extract_strided_slice %178 {offsets = [0, 0], sizes = [2, 32], strides = [1, 1]} : vector<2x128xf32> to vector<2x32xf32>
    %181 = vector.extract_strided_slice %178 {offsets = [0, 32], sizes = [2, 32], strides = [1, 1]} : vector<2x128xf32> to vector<2x32xf32>
    %182 = vector.extract_strided_slice %179 {offsets = [0, 64], sizes = [2, 32], strides = [1, 1]} : vector<2x128xf32> to vector<2x32xf32>
    %183 = vector.extract_strided_slice %178 {offsets = [0, 96], sizes = [2, 32], strides = [1, 1]} : vector<2x128xf32> to vector<2x32xf32>
    %184 = arith.mulf %181, %164 : vector<2x32xf32>
    %185 = arith.mulf %180, %182 : vector<2x32xf32>
    %186 = arith.addf %184, %185 : vector<2x32xf32>
    %187 = math.tanh %186 : vector<2x32xf32>
    %188 = arith.mulf %183, %187 : vector<2x32xf32>
    %c14 = arith.constant 14 : index
    %c0_58 = arith.constant 0 : index
    %189 = vector.load %arg16[%c14, %c0_58] : memref<16x32xf32, #tpu.memory_space<vmem>>, vector<2x32xf32>
    tpu.vector_store %arg16[%c14, %c0_58], %188 {strides = array<i32>} : memref<16x32xf32, #tpu.memory_space<vmem>>, vector<2x32xf32>,
    %c0_59 = arith.constant 0 : index
    %c0_60 = arith.constant 0 : index
    %c0_61 = arith.constant 0 : index
    %190 = vector.load %arg14[%c0_59, %c0_60, %c0_61] : memref<2x2x32xf32, #tpu.memory_space<vmem>>, vector<1x2x32xf32>
    %191 = vector.shape_cast %190 : vector<1x2x32xf32> to vector<2x32xf32>
    %192 = vector.shape_cast %188 : vector<2x32xf32> to vector<1x2x32xf32>
    tpu.vector_store %arg14[%c0_59, %c0_60, %c0_61], %192 {strides = array<i32>} : memref<2x2x32xf32, #tpu.memory_space<vmem>>, vector<1x2x32xf32>,
    %c0_62 = arith.constant 0 : index
    %c0_63 = arith.constant 0 : index
    %c0_64 = arith.constant 0 : index
    %193 = vector.load %arg15[%c0_62, %c0_63, %c0_64] : memref<2x2x32xf32, #tpu.memory_space<vmem>>, vector<1x2x32xf32>
    %194 = vector.shape_cast %193 : vector<1x2x32xf32> to vector<2x32xf32>
    %195 = vector.shape_cast %186 : vector<2x32xf32> to vector<1x2x32xf32>
    tpu.vector_store %arg15[%c0_62, %c0_63, %c0_64], %195 {strides = array<i32>} : memref<2x2x32xf32, #tpu.memory_space<vmem>>, vector<1x2x32xf32>,
    %c0_65 = arith.constant 0 : index
    %c0_66 = arith.constant 0 : index
    %196 = vector.load %arg16[%c0_65, %c0_66] : memref<16x32xf32, #tpu.memory_space<vmem>>, vector<16x32xf32>
    %c0_67 = arith.constant 0 : index
    %c0_68 = arith.constant 0 : index
    %197 = vector.load %arg8[%c0_67, %c0_68] : memref<32x128xf32, #tpu.memory_space<vmem>>, vector<32x128xf32>
    %cst_69 = arith.constant dense<0.000000e+00> : vector<16x128xf32>
    %198 = tpu.matmul %196, %197, %cst_69 {dimension_numbers = #tpu.dot_dimension_numbers<[1], [0], [0], [1], [0, 0, 1, 1], [], []>} : vector<16x32xf32>, vector<32x128xf32>, vector<16x128xf32> -> vector<16x128xf32>
    %c0_70 = arith.constant 0 : index
    %c0_71 = arith.constant 0 : index
    %199 = vector.load %arg10[%c0_70, %c0_71] : memref<1x128xf32, #tpu.memory_space<vmem>>, vector<1x128xf32>
    %200 = vector.broadcast %199 : vector<1x128xf32> to vector<16x128xf32>
    %201 = arith.addf %198, %200 : vector<16x128xf32>
    %c0_72 = arith.constant 0 : index
    %c0_73 = arith.constant 0 : index
    %202 = vector.load %arg9[%c0_72, %c0_73] : memref<32x128xf32, #tpu.memory_space<vmem>>, vector<32x128xf32>
    %c1 = arith.constant 1 : index
    %c0_74 = arith.constant 0 : index
    %c0_75 = arith.constant 0 : index
    %203 = vector.load %arg2[%c1, %c0_74, %c0_75] : memref<2x2x32xf32, #tpu.memory_space<vmem>>, vector<1x2x32xf32>
    %204 = vector.shape_cast %203 : vector<1x2x32xf32> to vector<2x32xf32>
    %c1_76 = arith.constant 1 : index
    %c0_77 = arith.constant 0 : index
    %c0_78 = arith.constant 0 : index
    %205 = vector.load %arg3[%c1_76, %c0_77, %c0_78] : memref<2x2x32xf32, #tpu.memory_space<vmem>>, vector<1x2x32xf32>
    %206 = vector.shape_cast %205 : vector<1x2x32xf32> to vector<2x32xf32>
    %207 = vector.extract_strided_slice %201 {offsets = [0, 0], sizes = [2, 128], strides = [1, 1]} : vector<16x128xf32> to vector<2x128xf32>
    %cst_79 = arith.constant dense<0.000000e+00> : vector<2x128xf32>
    %208 = tpu.matmul %204, %202, %cst_79 {dimension_numbers = #tpu.dot_dimension_numbers<[1], [0], [0], [1], [0, 0, 1, 1], [], []>} : vector<2x32xf32>, vector<32x128xf32>, vector<2x128xf32> -> vector<2x128xf32>
    %209 = arith.addf %207, %208 : vector<2x128xf32>
    %cst_80 = arith.constant 0.000000e+00 : f32
    %210 = vector.broadcast %cst_80 : f32 to vector<2x128xf32>
    %211 = arith.subf %210, %209 : vector<2x128xf32>
    %212 = math.exp %211 : vector<2x128xf32>
    %cst_81 = arith.constant 1.000000e+00 : f32
    %213 = vector.broadcast %cst_81 : f32 to vector<2x128xf32>
    %214 = arith.addf %213, %212 : vector<2x128xf32>
    %cst_82 = arith.constant 1.000000e+00 : f32
    %215 = vector.broadcast %cst_82 : f32 to vector<2x128xf32>
    %216 = arith.divf %215, %214 : vector<2x128xf32>
    %217 = math.tanh %209 : vector<2x128xf32>
    %218 = vector.extract_strided_slice %216 {offsets = [0, 0], sizes = [2, 32], strides = [1, 1]} : vector<2x128xf32> to vector<2x32xf32>
    %219 = vector.extract_strided_slice %216 {offsets = [0, 32], sizes = [2, 32], strides = [1, 1]} : vector<2x128xf32> to vector<2x32xf32>
    %220 = vector.extract_strided_slice %217 {offsets = [0, 64], sizes = [2, 32], strides = [1, 1]} : vector<2x128xf32> to vector<2x32xf32>
    %221 = vector.extract_strided_slice %216 {offsets = [0, 96], sizes = [2, 32], strides = [1, 1]} : vector<2x128xf32> to vector<2x32xf32>
    %222 = arith.mulf %219, %206 : vector<2x32xf32>
    %223 = arith.mulf %218, %220 : vector<2x32xf32>
    %224 = arith.addf %222, %223 : vector<2x32xf32>
    %225 = math.tanh %224 : vector<2x32xf32>
    %226 = arith.mulf %221, %225 : vector<2x32xf32>
    %c0_83 = arith.constant 0 : index
    %c0_84 = arith.constant 0 : index
    %227 = vector.load %arg16[%c0_83, %c0_84] : memref<16x32xf32, #tpu.memory_space<vmem>>, vector<2x32xf32>
    tpu.vector_store %arg16[%c0_83, %c0_84], %226 {strides = array<i32>} : memref<16x32xf32, #tpu.memory_space<vmem>>, vector<2x32xf32>,
    %228 = vector.extract_strided_slice %201 {offsets = [2, 0], sizes = [2, 128], strides = [1, 1]} : vector<16x128xf32> to vector<2x128xf32>
    %cst_85 = arith.constant dense<0.000000e+00> : vector<2x128xf32>
    %229 = tpu.matmul %226, %202, %cst_85 {dimension_numbers = #tpu.dot_dimension_numbers<[1], [0], [0], [1], [0, 0, 1, 1], [], []>} : vector<2x32xf32>, vector<32x128xf32>, vector<2x128xf32> -> vector<2x128xf32>
    %230 = arith.addf %228, %229 : vector<2x128xf32>
    %cst_86 = arith.constant 0.000000e+00 : f32
    %231 = vector.broadcast %cst_86 : f32 to vector<2x128xf32>
    %232 = arith.subf %231, %230 : vector<2x128xf32>
    %233 = math.exp %232 : vector<2x128xf32>
    %cst_87 = arith.constant 1.000000e+00 : f32
    %234 = vector.broadcast %cst_87 : f32 to vector<2x128xf32>
    %235 = arith.addf %234, %233 : vector<2x128xf32>
    %cst_88 = arith.constant 1.000000e+00 : f32
    %236 = vector.broadcast %cst_88 : f32 to vector<2x128xf32>
    %237 = arith.divf %236, %235 : vector<2x128xf32>
    %238 = math.tanh %230 : vector<2x128xf32>
    %239 = vector.extract_strided_slice %237 {offsets = [0, 0], sizes = [2, 32], strides = [1, 1]} : vector<2x128xf32> to vector<2x32xf32>
    %240 = vector.extract_strided_slice %237 {offsets = [0, 32], sizes = [2, 32], strides = [1, 1]} : vector<2x128xf32> to vector<2x32xf32>
    %241 = vector.extract_strided_slice %238 {offsets = [0, 64], sizes = [2, 32], strides = [1, 1]} : vector<2x128xf32> to vector<2x32xf32>
    %242 = vector.extract_strided_slice %237 {offsets = [0, 96], sizes = [2, 32], strides = [1, 1]} : vector<2x128xf32> to vector<2x32xf32>
    %243 = arith.mulf %240, %224 : vector<2x32xf32>
    %244 = arith.mulf %239, %241 : vector<2x32xf32>
    %245 = arith.addf %243, %244 : vector<2x32xf32>
    %246 = math.tanh %245 : vector<2x32xf32>
    %247 = arith.mulf %242, %246 : vector<2x32xf32>
    %c2_89 = arith.constant 2 : index
    %c0_90 = arith.constant 0 : index
    %248 = vector.load %arg16[%c2_89, %c0_90] : memref<16x32xf32, #tpu.memory_space<vmem>>, vector<2x32xf32>
    tpu.vector_store %arg16[%c2_89, %c0_90], %247 {strides = array<i32>} : memref<16x32xf32, #tpu.memory_space<vmem>>, vector<2x32xf32>,
    %249 = vector.extract_strided_slice %201 {offsets = [4, 0], sizes = [2, 128], strides = [1, 1]} : vector<16x128xf32> to vector<2x128xf32>
    %cst_91 = arith.constant dense<0.000000e+00> : vector<2x128xf32>
    %250 = tpu.matmul %247, %202, %cst_91 {dimension_numbers = #tpu.dot_dimension_numbers<[1], [0], [0], [1], [0, 0, 1, 1], [], []>} : vector<2x32xf32>, vector<32x128xf32>, vector<2x128xf32> -> vector<2x128xf32>
    %251 = arith.addf %249, %250 : vector<2x128xf32>
    %cst_92 = arith.constant 0.000000e+00 : f32
    %252 = vector.broadcast %cst_92 : f32 to vector<2x128xf32>
    %253 = arith.subf %252, %251 : vector<2x128xf32>
    %254 = math.exp %253 : vector<2x128xf32>
    %cst_93 = arith.constant 1.000000e+00 : f32
    %255 = vector.broadcast %cst_93 : f32 to vector<2x128xf32>
    %256 = arith.addf %255, %254 : vector<2x128xf32>
    %cst_94 = arith.constant 1.000000e+00 : f32
    %257 = vector.broadcast %cst_94 : f32 to vector<2x128xf32>
    %258 = arith.divf %257, %256 : vector<2x128xf32>
    %259 = math.tanh %251 : vector<2x128xf32>
    %260 = vector.extract_strided_slice %258 {offsets = [0, 0], sizes = [2, 32], strides = [1, 1]} : vector<2x128xf32> to vector<2x32xf32>
    %261 = vector.extract_strided_slice %258 {offsets = [0, 32], sizes = [2, 32], strides = [1, 1]} : vector<2x128xf32> to vector<2x32xf32>
    %262 = vector.extract_strided_slice %259 {offsets = [0, 64], sizes = [2, 32], strides = [1, 1]} : vector<2x128xf32> to vector<2x32xf32>
    %263 = vector.extract_strided_slice %258 {offsets = [0, 96], sizes = [2, 32], strides = [1, 1]} : vector<2x128xf32> to vector<2x32xf32>
    %264 = arith.mulf %261, %245 : vector<2x32xf32>
    %265 = arith.mulf %260, %262 : vector<2x32xf32>
    %266 = arith.addf %264, %265 : vector<2x32xf32>
    %267 = math.tanh %266 : vector<2x32xf32>
    %268 = arith.mulf %263, %267 : vector<2x32xf32>
    %c4_95 = arith.constant 4 : index
    %c0_96 = arith.constant 0 : index
    %269 = vector.load %arg16[%c4_95, %c0_96] : memref<16x32xf32, #tpu.memory_space<vmem>>, vector<2x32xf32>
    tpu.vector_store %arg16[%c4_95, %c0_96], %268 {strides = array<i32>} : memref<16x32xf32, #tpu.memory_space<vmem>>, vector<2x32xf32>,
    %270 = vector.extract_strided_slice %201 {offsets = [6, 0], sizes = [2, 128], strides = [1, 1]} : vector<16x128xf32> to vector<2x128xf32>
    %cst_97 = arith.constant dense<0.000000e+00> : vector<2x128xf32>
    %271 = tpu.matmul %268, %202, %cst_97 {dimension_numbers = #tpu.dot_dimension_numbers<[1], [0], [0], [1], [0, 0, 1, 1], [], []>} : vector<2x32xf32>, vector<32x128xf32>, vector<2x128xf32> -> vector<2x128xf32>
    %272 = arith.addf %270, %271 : vector<2x128xf32>
    %cst_98 = arith.constant 0.000000e+00 : f32
    %273 = vector.broadcast %cst_98 : f32 to vector<2x128xf32>
    %274 = arith.subf %273, %272 : vector<2x128xf32>
    %275 = math.exp %274 : vector<2x128xf32>
    %cst_99 = arith.constant 1.000000e+00 : f32
    %276 = vector.broadcast %cst_99 : f32 to vector<2x128xf32>
    %277 = arith.addf %276, %275 : vector<2x128xf32>
    %cst_100 = arith.constant 1.000000e+00 : f32
    %278 = vector.broadcast %cst_100 : f32 to vector<2x128xf32>
    %279 = arith.divf %278, %277 : vector<2x128xf32>
    %280 = math.tanh %272 : vector<2x128xf32>
    %281 = vector.extract_strided_slice %279 {offsets = [0, 0], sizes = [2, 32], strides = [1, 1]} : vector<2x128xf32> to vector<2x32xf32>
    %282 = vector.extract_strided_slice %279 {offsets = [0, 32], sizes = [2, 32], strides = [1, 1]} : vector<2x128xf32> to vector<2x32xf32>
    %283 = vector.extract_strided_slice %280 {offsets = [0, 64], sizes = [2, 32], strides = [1, 1]} : vector<2x128xf32> to vector<2x32xf32>
    %284 = vector.extract_strided_slice %279 {offsets = [0, 96], sizes = [2, 32], strides = [1, 1]} : vector<2x128xf32> to vector<2x32xf32>
    %285 = arith.mulf %282, %266 : vector<2x32xf32>
    %286 = arith.mulf %281, %283 : vector<2x32xf32>
    %287 = arith.addf %285, %286 : vector<2x32xf32>
    %288 = math.tanh %287 : vector<2x32xf32>
    %289 = arith.mulf %284, %288 : vector<2x32xf32>
    %c6_101 = arith.constant 6 : index
    %c0_102 = arith.constant 0 : index
    %290 = vector.load %arg16[%c6_101, %c0_102] : memref<16x32xf32, #tpu.memory_space<vmem>>, vector<2x32xf32>
    tpu.vector_store %arg16[%c6_101, %c0_102], %289 {strides = array<i32>} : memref<16x32xf32, #tpu.memory_space<vmem>>, vector<2x32xf32>,
    %291 = vector.extract_strided_slice %201 {offsets = [8, 0], sizes = [2, 128], strides = [1, 1]} : vector<16x128xf32> to vector<2x128xf32>
    %cst_103 = arith.constant dense<0.000000e+00> : vector<2x128xf32>
    %292 = tpu.matmul %289, %202, %cst_103 {dimension_numbers = #tpu.dot_dimension_numbers<[1], [0], [0], [1], [0, 0, 1, 1], [], []>} : vector<2x32xf32>, vector<32x128xf32>, vector<2x128xf32> -> vector<2x128xf32>
    %293 = arith.addf %291, %292 : vector<2x128xf32>
    %cst_104 = arith.constant 0.000000e+00 : f32
    %294 = vector.broadcast %cst_104 : f32 to vector<2x128xf32>
    %295 = arith.subf %294, %293 : vector<2x128xf32>
    %296 = math.exp %295 : vector<2x128xf32>
    %cst_105 = arith.constant 1.000000e+00 : f32
    %297 = vector.broadcast %cst_105 : f32 to vector<2x128xf32>
    %298 = arith.addf %297, %296 : vector<2x128xf32>
    %cst_106 = arith.constant 1.000000e+00 : f32
    %299 = vector.broadcast %cst_106 : f32 to vector<2x128xf32>
    %300 = arith.divf %299, %298 : vector<2x128xf32>
    %301 = math.tanh %293 : vector<2x128xf32>
    %302 = vector.extract_strided_slice %300 {offsets = [0, 0], sizes = [2, 32], strides = [1, 1]} : vector<2x128xf32> to vector<2x32xf32>
    %303 = vector.extract_strided_slice %300 {offsets = [0, 32], sizes = [2, 32], strides = [1, 1]} : vector<2x128xf32> to vector<2x32xf32>
    %304 = vector.extract_strided_slice %301 {offsets = [0, 64], sizes = [2, 32], strides = [1, 1]} : vector<2x128xf32> to vector<2x32xf32>
    %305 = vector.extract_strided_slice %300 {offsets = [0, 96], sizes = [2, 32], strides = [1, 1]} : vector<2x128xf32> to vector<2x32xf32>
    %306 = arith.mulf %303, %287 : vector<2x32xf32>
    %307 = arith.mulf %302, %304 : vector<2x32xf32>
    %308 = arith.addf %306, %307 : vector<2x32xf32>
    %309 = math.tanh %308 : vector<2x32xf32>
    %310 = arith.mulf %305, %309 : vector<2x32xf32>
    %c8_107 = arith.constant 8 : index
    %c0_108 = arith.constant 0 : index
    %311 = vector.load %arg16[%c8_107, %c0_108] : memref<16x32xf32, #tpu.memory_space<vmem>>, vector<2x32xf32>
    tpu.vector_store %arg16[%c8_107, %c0_108], %310 {strides = array<i32>} : memref<16x32xf32, #tpu.memory_space<vmem>>, vector<2x32xf32>,
    %312 = vector.extract_strided_slice %201 {offsets = [10, 0], sizes = [2, 128], strides = [1, 1]} : vector<16x128xf32> to vector<2x128xf32>
    %cst_109 = arith.constant dense<0.000000e+00> : vector<2x128xf32>
    %313 = tpu.matmul %310, %202, %cst_109 {dimension_numbers = #tpu.dot_dimension_numbers<[1], [0], [0], [1], [0, 0, 1, 1], [], []>} : vector<2x32xf32>, vector<32x128xf32>, vector<2x128xf32> -> vector<2x128xf32>
    %314 = arith.addf %312, %313 : vector<2x128xf32>
    %cst_110 = arith.constant 0.000000e+00 : f32
    %315 = vector.broadcast %cst_110 : f32 to vector<2x128xf32>
    %316 = arith.subf %315, %314 : vector<2x128xf32>
    %317 = math.exp %316 : vector<2x128xf32>
    %cst_111 = arith.constant 1.000000e+00 : f32
    %318 = vector.broadcast %cst_111 : f32 to vector<2x128xf32>
    %319 = arith.addf %318, %317 : vector<2x128xf32>
    %cst_112 = arith.constant 1.000000e+00 : f32
    %320 = vector.broadcast %cst_112 : f32 to vector<2x128xf32>
    %321 = arith.divf %320, %319 : vector<2x128xf32>
    %322 = math.tanh %314 : vector<2x128xf32>
    %323 = vector.extract_strided_slice %321 {offsets = [0, 0], sizes = [2, 32], strides = [1, 1]} : vector<2x128xf32> to vector<2x32xf32>
    %324 = vector.extract_strided_slice %321 {offsets = [0, 32], sizes = [2, 32], strides = [1, 1]} : vector<2x128xf32> to vector<2x32xf32>
    %325 = vector.extract_strided_slice %322 {offsets = [0, 64], sizes = [2, 32], strides = [1, 1]} : vector<2x128xf32> to vector<2x32xf32>
    %326 = vector.extract_strided_slice %321 {offsets = [0, 96], sizes = [2, 32], strides = [1, 1]} : vector<2x128xf32> to vector<2x32xf32>
    %327 = arith.mulf %324, %308 : vector<2x32xf32>
    %328 = arith.mulf %323, %325 : vector<2x32xf32>
    %329 = arith.addf %327, %328 : vector<2x32xf32>
    %330 = math.tanh %329 : vector<2x32xf32>
    %331 = arith.mulf %326, %330 : vector<2x32xf32>
    %c10_113 = arith.constant 10 : index
    %c0_114 = arith.constant 0 : index
    %332 = vector.load %arg16[%c10_113, %c0_114] : memref<16x32xf32, #tpu.memory_space<vmem>>, vector<2x32xf32>
    tpu.vector_store %arg16[%c10_113, %c0_114], %331 {strides = array<i32>} : memref<16x32xf32, #tpu.memory_space<vmem>>, vector<2x32xf32>,
    %333 = vector.extract_strided_slice %201 {offsets = [12, 0], sizes = [2, 128], strides = [1, 1]} : vector<16x128xf32> to vector<2x128xf32>
    %cst_115 = arith.constant dense<0.000000e+00> : vector<2x128xf32>
    %334 = tpu.matmul %331, %202, %cst_115 {dimension_numbers = #tpu.dot_dimension_numbers<[1], [0], [0], [1], [0, 0, 1, 1], [], []>} : vector<2x32xf32>, vector<32x128xf32>, vector<2x128xf32> -> vector<2x128xf32>
    %335 = arith.addf %333, %334 : vector<2x128xf32>
    %cst_116 = arith.constant 0.000000e+00 : f32
    %336 = vector.broadcast %cst_116 : f32 to vector<2x128xf32>
    %337 = arith.subf %336, %335 : vector<2x128xf32>
    %338 = math.exp %337 : vector<2x128xf32>
    %cst_117 = arith.constant 1.000000e+00 : f32
    %339 = vector.broadcast %cst_117 : f32 to vector<2x128xf32>
    %340 = arith.addf %339, %338 : vector<2x128xf32>
    %cst_118 = arith.constant 1.000000e+00 : f32
    %341 = vector.broadcast %cst_118 : f32 to vector<2x128xf32>
    %342 = arith.divf %341, %340 : vector<2x128xf32>
    %343 = math.tanh %335 : vector<2x128xf32>
    %344 = vector.extract_strided_slice %342 {offsets = [0, 0], sizes = [2, 32], strides = [1, 1]} : vector<2x128xf32> to vector<2x32xf32>
    %345 = vector.extract_strided_slice %342 {offsets = [0, 32], sizes = [2, 32], strides = [1, 1]} : vector<2x128xf32> to vector<2x32xf32>
    %346 = vector.extract_strided_slice %343 {offsets = [0, 64], sizes = [2, 32], strides = [1, 1]} : vector<2x128xf32> to vector<2x32xf32>
    %347 = vector.extract_strided_slice %342 {offsets = [0, 96], sizes = [2, 32], strides = [1, 1]} : vector<2x128xf32> to vector<2x32xf32>
    %348 = arith.mulf %345, %329 : vector<2x32xf32>
    %349 = arith.mulf %344, %346 : vector<2x32xf32>
    %350 = arith.addf %348, %349 : vector<2x32xf32>
    %351 = math.tanh %350 : vector<2x32xf32>
    %352 = arith.mulf %347, %351 : vector<2x32xf32>
    %c12_119 = arith.constant 12 : index
    %c0_120 = arith.constant 0 : index
    %353 = vector.load %arg16[%c12_119, %c0_120] : memref<16x32xf32, #tpu.memory_space<vmem>>, vector<2x32xf32>
    tpu.vector_store %arg16[%c12_119, %c0_120], %352 {strides = array<i32>} : memref<16x32xf32, #tpu.memory_space<vmem>>, vector<2x32xf32>,
    %354 = vector.extract_strided_slice %201 {offsets = [14, 0], sizes = [2, 128], strides = [1, 1]} : vector<16x128xf32> to vector<2x128xf32>
    %cst_121 = arith.constant dense<0.000000e+00> : vector<2x128xf32>
    %355 = tpu.matmul %352, %202, %cst_121 {dimension_numbers = #tpu.dot_dimension_numbers<[1], [0], [0], [1], [0, 0, 1, 1], [], []>} : vector<2x32xf32>, vector<32x128xf32>, vector<2x128xf32> -> vector<2x128xf32>
    %356 = arith.addf %354, %355 : vector<2x128xf32>
    %cst_122 = arith.constant 0.000000e+00 : f32
    %357 = vector.broadcast %cst_122 : f32 to vector<2x128xf32>
    %358 = arith.subf %357, %356 : vector<2x128xf32>
    %359 = math.exp %358 : vector<2x128xf32>
    %cst_123 = arith.constant 1.000000e+00 : f32
    %360 = vector.broadcast %cst_123 : f32 to vector<2x128xf32>
    %361 = arith.addf %360, %359 : vector<2x128xf32>
    %cst_124 = arith.constant 1.000000e+00 : f32
    %362 = vector.broadcast %cst_124 : f32 to vector<2x128xf32>
    %363 = arith.divf %362, %361 : vector<2x128xf32>
    %364 = math.tanh %356 : vector<2x128xf32>
    %365 = vector.extract_strided_slice %363 {offsets = [0, 0], sizes = [2, 32], strides = [1, 1]} : vector<2x128xf32> to vector<2x32xf32>
    %366 = vector.extract_strided_slice %363 {offsets = [0, 32], sizes = [2, 32], strides = [1, 1]} : vector<2x128xf32> to vector<2x32xf32>
    %367 = vector.extract_strided_slice %364 {offsets = [0, 64], sizes = [2, 32], strides = [1, 1]} : vector<2x128xf32> to vector<2x32xf32>
    %368 = vector.extract_strided_slice %363 {offsets = [0, 96], sizes = [2, 32], strides = [1, 1]} : vector<2x128xf32> to vector<2x32xf32>
    %369 = arith.mulf %366, %350 : vector<2x32xf32>
    %370 = arith.mulf %365, %367 : vector<2x32xf32>
    %371 = arith.addf %369, %370 : vector<2x32xf32>
    %372 = math.tanh %371 : vector<2x32xf32>
    %373 = arith.mulf %368, %372 : vector<2x32xf32>
    %c14_125 = arith.constant 14 : index
    %c0_126 = arith.constant 0 : index
    %374 = vector.load %arg16[%c14_125, %c0_126] : memref<16x32xf32, #tpu.memory_space<vmem>>, vector<2x32xf32>
    tpu.vector_store %arg16[%c14_125, %c0_126], %373 {strides = array<i32>} : memref<16x32xf32, #tpu.memory_space<vmem>>, vector<2x32xf32>,
    %c1_127 = arith.constant 1 : index
    %c0_128 = arith.constant 0 : index
    %c0_129 = arith.constant 0 : index
    %375 = vector.load %arg14[%c1_127, %c0_128, %c0_129] : memref<2x2x32xf32, #tpu.memory_space<vmem>>, vector<1x2x32xf32>
    %376 = vector.shape_cast %375 : vector<1x2x32xf32> to vector<2x32xf32>
    %377 = vector.shape_cast %373 : vector<2x32xf32> to vector<1x2x32xf32>
    tpu.vector_store %arg14[%c1_127, %c0_128, %c0_129], %377 {strides = array<i32>} : memref<2x2x32xf32, #tpu.memory_space<vmem>>, vector<1x2x32xf32>,
    %c1_130 = arith.constant 1 : index
    %c0_131 = arith.constant 0 : index
    %c0_132 = arith.constant 0 : index
    %378 = vector.load %arg15[%c1_130, %c0_131, %c0_132] : memref<2x2x32xf32, #tpu.memory_space<vmem>>, vector<1x2x32xf32>
    %379 = vector.shape_cast %378 : vector<1x2x32xf32> to vector<2x32xf32>
    %380 = vector.shape_cast %371 : vector<2x32xf32> to vector<1x2x32xf32>
    tpu.vector_store %arg15[%c1_130, %c0_131, %c0_132], %380 {strides = array<i32>} : memref<2x2x32xf32, #tpu.memory_space<vmem>>, vector<1x2x32xf32>,
    %c0_133 = arith.constant 0 : index
    %c0_134 = arith.constant 0 : index
    %381 = vector.load %arg16[%c0_133, %c0_134] : memref<16x32xf32, #tpu.memory_space<vmem>>, vector<16x32xf32>
    %c0_135 = arith.constant 0 : index
    %c0_136 = arith.constant 0 : index
    %382 = vector.load %arg11[%c0_135, %c0_136] : memref<32x128xf32, #tpu.memory_space<vmem>>, vector<32x128xf32>
    %cst_137 = arith.constant dense<0.000000e+00> : vector<16x128xf32>
    %383 = tpu.matmul %381, %382, %cst_137 {dimension_numbers = #tpu.dot_dimension_numbers<[1], [0], [0], [1], [0, 0, 1, 1], [], []>} : vector<16x32xf32>, vector<32x128xf32>, vector<16x128xf32> -> vector<16x128xf32>
    %c0_138 = arith.constant 0 : index
    %c0_139 = arith.constant 0 : index
    %384 = vector.load %arg12[%c0_138, %c0_139] : memref<1x128xf32, #tpu.memory_space<vmem>>, vector<1x128xf32>
    %385 = vector.broadcast %384 : vector<1x128xf32> to vector<16x128xf32>
    %386 = arith.addf %383, %385 : vector<16x128xf32>
    %c0_140 = arith.constant 0 : index
    %c0_141 = arith.constant 0 : index
    %387 = vector.load %arg13[%c0_140, %c0_141] : memref<16x128xf32, #tpu.memory_space<vmem>>, vector<16x128xf32>
    tpu.vector_store %arg13[%c0_140, %c0_141], %386 {strides = array<i32>} : memref<16x128xf32, #tpu.memory_space<vmem>>, vector<16x128xf32>,
    return
  }
}

</mosaic_0001>

<llo_original>
// kernel: decoder_forward.1
$region0: #{decoder_forward.1}
  #allocation0 [shape = 'u32[]', space=smem, size = 0x4, offset = 0x4, fixed_abs, tag = 'smem constant byte address 0x4 - core index']
  #allocation1 [shape = 'u32[144,128]{1,0:T(1,128)}', space=vmem, size = 0x12000, scoped, tag = 'internal scratch']
  #allocation2 [shape = 'f32[16,32]{1,0:T(8,128)}', space=vmem, size = 0x2000, scoped, tag = 'scratch operand']
  %s0 = inlined_call_operand.vmem [shape: f32[16,16], index: 0, kind: input, shape index: {}]
  %s1 = inlined_call_operand.vmem [shape: f32[2,16], index: 1, kind: input, shape index: {}]
  %s2 = inlined_call_operand.vmem [shape: f32[2,2,32], index: 2, kind: input, shape index: {}, may-alias: {2,3}]
  %s3 = inlined_call_operand.vmem [shape: f32[2,2,32], index: 3, kind: input, shape index: {}, may-alias: {2,3}]
  %s4 = inlined_call_operand.vmem [shape: f32[16,128], index: 4, kind: input, shape index: {}]
  %s5 = inlined_call_operand.vmem [shape: f32[16,128], index: 5, kind: input, shape index: {}]
  %s6 = inlined_call_operand.vmem [shape: f32[32,128], index: 6, kind: input, shape index: {}]
  %s7 = inlined_call_operand.hbm [shape: f32[1,128], index: 7, kind: input, shape index: {}]
  %s8 = inlined_call_operand.vmem [shape: f32[32,128], index: 8, kind: input, shape index: {}]
  %s9 = inlined_call_operand.vmem [shape: f32[32,128], index: 9, kind: input, shape index: {}]
  %s10 = inlined_call_operand.hbm [shape: f32[1,128], index: 10, kind: input, shape index: {}]
  %s11 = inlined_call_operand.hbm [shape: f32[32,128], index: 11, kind: input, shape index: {}]
  %s12 = inlined_call_operand.hbm [shape: f32[1,128], index: 12, kind: input, shape index: {}]
  %s13 = inlined_call_operand.vmem [shape: f32[16,128], index: 13, kind: output, shape index: {0}]
  %s14 = inlined_call_operand.hbm [shape: f32[2,2,32], index: 14, kind: output, shape index: {1}]
  %s15 = inlined_call_operand.hbm [shape: f32[2,2,32], index: 15, kind: output, shape index: {2}]
  %16 = xla_tuple %s13, %s14, %s15
  %s17 = sld [smem:[#allocation0]]
  $region94: #{decoder_forward.1} parent=0
    _
  %s19 = ssub.s32 1, %s17
  %s20 = scalar_select 0, %s19, %s17
  $region1: #{decoder_forward.1} parent=0
    #allocation3 [shape = 'u8[512]{0}', space=vmem, size = 0x400, scoped, tag = 'input window, operand 7, single buffered']
    #allocation4 [shape = 's32[1]{0}', space=sflag, size = 0x4, scoped, tag = 'scoped memory for decoder_forward.1']
    #allocation5 [shape = 's32[1]{0}', space=sflag, size = 0x4, scoped, tag = 'scoped memory for decoder_forward.1']
    #allocation6 [shape = 'u8[512]{0}', space=vmem, size = 0x400, scoped, tag = 'input window, operand 10, single buffered']
    #allocation7 [shape = 's32[1]{0}', space=sflag, size = 0x4, scoped, tag = 'scoped memory for decoder_forward.1']
    #allocation8 [shape = 'u8[16384]{0}', space=vmem, size = 0x4000, scoped, tag = 'input window, operand 11, single buffered']
    #allocation9 [shape = 'u8[512]{0}', space=vmem, size = 0x400, scoped, tag = 'input window, operand 12, single buffered']
    #allocation10 [shape = 's32[1]{0}', space=sflag, size = 0x4, scoped, tag = 'scoped memory for decoder_forward.1']
    #allocation11 [shape = 'u8[2048]{0}', space=vmem, size = 0x800, scoped, tag = 'output window, operand 1, single buffered']
    #allocation12 [shape = 'u8[2048]{0}', space=vmem, size = 0x800, scoped, tag = 'output window, operand 2, single buffered']
    #allocation13 [shape = 's32[1]{0}', space=sflag, size = 0x4, scoped, tag = 'scoped memory for decoder_forward.1']
    %21 = vsyncpa [#allocation4], 0
    %22 = vsyncpa [#allocation7], 0
    %23 = vsyncpa [#allocation10], 0
    %24 = vsyncpa [#allocation5], 0
    %25 = vsyncpa [#allocation13], 0
    // Predicated region
    $region2: #{decoder_forward.1} parent=1 // pred_check
      _
    $region3: #{decoder_forward.1} parent=1 // pred_check_branch
      %27 = sbr.rel (0) target = $region5
    $region4: #{decoder_forward.1} parent=1 // pred_region
      _
    $region5: #{decoder_forward.1} parent=1 // pred_fallthru
      _
    // Predicated region
    $region6: #{decoder_forward.1} parent=1 // pred_check
      _
    $region7: #{decoder_forward.1} parent=1 // pred_check_branch
      %29 = sbr.rel (0) target = $region9
    $region8: #{decoder_forward.1} parent=1 // pred_region
      _
    $region9: #{decoder_forward.1} parent=1 // pred_fallthru
      _
    // Predicated region
    $region10: #{decoder_forward.1} parent=1 // pred_check
      _
    $region11: #{decoder_forward.1} parent=1 // pred_check_branch
      %31 = sbr.rel (0) target = $region13
    $region12: #{decoder_forward.1} parent=1 // pred_region
      _
    $region13: #{decoder_forward.1} parent=1 // pred_fallthru
      _
    // Predicated region
    $region14: #{decoder_forward.1} parent=1 // pred_check
      _
    $region15: #{decoder_forward.1} parent=1 // pred_check_branch
      %33 = sbr.rel (0) target = $region17
    $region16: #{decoder_forward.1} parent=1 // pred_region
      _
    $region17: #{decoder_forward.1} parent=1 // pred_fallthru
      _
    // Predicated region
    $region18: #{decoder_forward.1} parent=1 // pred_check
      _
    $region19: #{decoder_forward.1} parent=1 // pred_check_branch
      %35 = sbr.rel (0) target = $region21
    $region20: #{decoder_forward.1} parent=1 // pred_region
      _
    $region21: #{decoder_forward.1} parent=1 // pred_fallthru
      _
    // Predicated region
    $region22: #{decoder_forward.1} parent=1 // pred_check
      _
    $region23: #{decoder_forward.1} parent=1 // pred_check_branch
      %37 = sbr.rel (0) target = $region25
    $region24: #{decoder_forward.1} parent=1 // pred_region
      _
    $region25: #{decoder_forward.1} parent=1 // pred_fallthru
      _
    // Predicated region
    $region26: #{decoder_forward.1} parent=1 // pred_check
      _
    $region27: #{decoder_forward.1} parent=1 // pred_check_branch
      %39 = sbr.rel (0) target = $region29
    $region28: #{decoder_forward.1} parent=1 // pred_region
      _
    $region29: #{decoder_forward.1} parent=1 // pred_fallthru
      _
    // Predicated region
    $region30: #{decoder_forward.1} parent=1 // pred_check
      _
    $region31: #{decoder_forward.1} parent=1 // pred_check_branch
      %41 = sbr.rel (0) target = $region33
    $region32: #{decoder_forward.1} parent=1 // pred_region
      %s43 = ssub.s32 16, 16
      %44 = vsyncadd [#allocation4], %s43
      %s46 = sshll.u32 [#allocation3], 4
      %s47 = int_to_ptr.vmem [resolvable:$true] %s46
      %49 = dma.hbm_to_vmem [thread:$0]  %s7, 16, %s47, [#allocation4]
    $region33: #{decoder_forward.1} parent=1 // pred_fallthru
      _
    // Predicated region
    $region34: #{decoder_forward.1} parent=1 // pred_check
      _
    $region35: #{decoder_forward.1} parent=1 // pred_check_branch
      %51 = sbr.rel (0) target = $region37
    $region36: #{decoder_forward.1} parent=1 // pred_region
      _
    $region37: #{decoder_forward.1} parent=1 // pred_fallthru
      _
    // Predicated region
    $region38: #{decoder_forward.1} parent=1 // pred_check
      _
    $region39: #{decoder_forward.1} parent=1 // pred_check_branch
      %53 = sbr.rel (0) target = $region41
    $region40: #{decoder_forward.1} parent=1 // pred_region
      _
    $region41: #{decoder_forward.1} parent=1 // pred_fallthru
      _
    // Predicated region
    $region42: #{decoder_forward.1} parent=1 // pred_check
      _
    $region43: #{decoder_forward.1} parent=1 // pred_check_branch
      %55 = sbr.rel (0) target = $region45
    $region44: #{decoder_forward.1} parent=1 // pred_region
      %s57 = ssub.s32 16, 16
      %58 = vsyncadd [#allocation7], %s57
      %s60 = sshll.u32 [#allocation6], 4
      %s61 = int_to_ptr.vmem [resolvable:$true] %s60
      %63 = dma.hbm_to_vmem [thread:$0]  %s10, 16, %s61, [#allocation7]
    $region45: #{decoder_forward.1} parent=1 // pred_fallthru
      _
    // Predicated region
    $region46: #{decoder_forward.1} parent=1 // pred_check
      _
    $region47: #{decoder_forward.1} parent=1 // pred_check_branch
      %65 = sbr.rel (0) target = $region49
    $region48: #{decoder_forward.1} parent=1 // pred_region
      %s67 = ssub.s32 512, 512
      %68 = vsyncadd [#allocation7], %s67
      %s69 = sshll.u32 [#allocation8], 4
      %s70 = int_to_ptr.vmem [resolvable:$true] %s69
      %75 = dma.hbm_to_vmem [thread:$0]  %s11, 512, %s70, [#allocation7], 128, 128, 8
    $region49: #{decoder_forward.1} parent=1 // pred_fallthru
      _
    // Predicated region
    $region50: #{decoder_forward.1} parent=1 // pred_check
      _
    $region51: #{decoder_forward.1} parent=1 // pred_check_branch
      %77 = sbr.rel (0) target = $region53
    $region52: #{decoder_forward.1} parent=1 // pred_region
      %s79 = ssub.s32 16, 16
      %80 = vsyncadd [#allocation10], %s79
      %s82 = sshll.u32 [#allocation9], 4
      %s83 = int_to_ptr.vmem [resolvable:$true] %s82
      %85 = dma.hbm_to_vmem [thread:$0]  %s12, 16, %s83, [#allocation10]
    $region53: #{decoder_forward.1} parent=1 // pred_fallthru
      _
    // Predicated region
    $region54: #{decoder_forward.1} parent=1 // pred_check
      _
    $region55: #{decoder_forward.1} parent=1 // pred_check_branch
      %87 = sbr.rel (0) target = $region57
    $region56: #{decoder_forward.1} parent=1 // pred_region
      %88 = dma.done [#allocation4], 16
    $region57: #{decoder_forward.1} parent=1 // pred_fallthru
      _
    // Predicated region
    $region58: #{decoder_forward.1} parent=1 // pred_check
      _
    $region59: #{decoder_forward.1} parent=1 // pred_check_branch
      %90 = sbr.rel (0) target = $region61
    $region60: #{decoder_forward.1} parent=1 // pred_region
      %91 = dma.done [#allocation7], 16
    $region61: #{decoder_forward.1} parent=1 // pred_fallthru
      _
    // Predicated region
    $region62: #{decoder_forward.1} parent=1 // pred_check
      _
    $region63: #{decoder_forward.1} parent=1 // pred_check_branch
      %93 = sbr.rel (0) target = $region65
    $region64: #{decoder_forward.1} parent=1 // pred_region
      %94 = dma.done [#allocation7], 512
    $region65: #{decoder_forward.1} parent=1 // pred_fallthru
      _
    // Predicated region
    $region66: #{decoder_forward.1} parent=1 // pred_check
      _
    $region67: #{decoder_forward.1} parent=1 // pred_check_branch
      %96 = sbr.rel (0) target = $region69
    $region68: #{decoder_forward.1} parent=1 // pred_region
      %97 = dma.done [#allocation10], 16
    $region69: #{decoder_forward.1} parent=1 // pred_fallthru
      _
    %v98 = vld [vmem:[%s0] sm:$0xff]
    %v99 = vld [vmem:[%s0 + $0x8] sm:$0xff]
    %v100 = vld [vmem:[%s4] sm:$0xff]
    %v101 = vld [vmem:[%s4 + $0x8] sm:$0xff]
    %vm102 = vcmask 130048
    %v104 = vsel %vm102, %v98, 0
    %v107 = vsel %vm102, %v99, 0
    %109 = vmatprep.subr.mxu0 0.0
    %110 = vmatpush1.msra.mxu0 %v100
    %111 = vmatprep.subr.mxu0 0.0
    %112 = vmatpush1.msra.mxu0 %v101
    %113 = vmatprep.subr.mxu0 0.0
    %114 = vmatpush1.msra.mxu0 0.0
    %115 = vmatprep.subr.mxu0 0.0
    %116 = vmatpush1.msra.mxu0 0.0
    %117 = vmatprep.subr.mxu0 0.0
    %118 = vmatpush1.msra.mxu0 0.0
    %119 = vmatprep.subr.mxu0 0.0
    %120 = vmatpush1.msra.mxu0 0.0
    %121 = vmatprep.subr.mxu0 0.0
    %122 = vmatpush1.msra.mxu0 0.0
    %123 = vmatprep.subr.mxu0 0.0
    %124 = vmatpush1.msra.mxu0 0.0
    %125 = vmatprep.subr.mxu0 0.0
    %126 = vmatpush1.msra.mxu0 0.0
    %127 = vmatprep.subr.mxu0 0.0
    %128 = vmatpush1.msra.mxu0 0.0
    %129 = vmatprep.subr.mxu0 0.0
    %130 = vmatpush1.msra.mxu0 0.0
    %131 = vmatprep.subr.mxu0 0.0
    %132 = vmatpush1.msra.mxu0 0.0
    %133 = vmatprep.subr.mxu0 0.0
    %134 = vmatpush1.msra.mxu0 0.0
    %135 = vmatprep.subr.mxu0 0.0
    %136 = vmatpush1.msra.mxu0 0.0
    %137 = vmatprep.subr.mxu0 0.0
    %138 = vmatpush1.msra.mxu0 0.0
    %139 = vmatprep.subr.mxu0 0.0
    %140 = vmatpush1.msra.mxu0 0.0
    %141 = vmatprep.subr.mxu0 0.0
    %142 = vmatpush1.msra.mxu0 0.0
    %143 = vmatprep.subr.mxu0 0.0
    %144 = vmatpush1.msra.mxu0 0.0
    %145 = vmatprep.subr.mxu0 0.0
    %146 = vmatpush1.msra.mxu0 0.0
    %147 = vmatprep.subr.mxu0 0.0
    %148 = vmatpush1.msra.mxu0 0.0
    %149 = vmatprep.subr.mxu0 0.0
    %150 = vmatpush1.msra.mxu0 0.0
    %151 = vmatprep.subr.mxu0 0.0
    %152 = vmatpush1.msra.mxu0 0.0
    %153 = vmatprep.subr.mxu0 0.0
    %154 = vmatpush1.msra.mxu0 0.0
    %155 = vmatprep.subr.mxu0 0.0
    %156 = vmatpush1.msra.mxu0 0.0
    %157 = vmatprep.subr.mxu0 0.0
    %158 = vmatpush1.msra.mxu0 0.0
    %159 = vmatprep.subr.mxu0 0.0
    %160 = vmatpush1.msra.mxu0 0.0
    %161 = vmatprep.subr.mxu0 0.0
    %162 = vmatpush1.msra.mxu0 0.0
    %163 = vmatprep.subr.mxu0 0.0
    %164 = vmatpush1.msra.mxu0 0.0
    %165 = vmatprep.subr.mxu0 0.0
    %166 = vmatpush1.msra.mxu0 0.0
    %167 = vmatprep.subr.mxu0 0.0
    %168 = vmatpush1.msra.mxu0 0.0
    %169 = vmatprep.subr.mxu0 0.0
    %170 = vmatpush1.msra.mxu0 0.0
    %171 = vmatprep.subr.mxu0 0.0
    %172 = vmatpush1.msra.mxu0 0.0
    %173 = vmatprep.mubr.f32.mxu0 0.0
    %174 = vmatmul.mubr.f32.gmra.mrb[0].mxu0 %v104
    %v175 = vpop.f32.mrb[0].mxu0
    %v176 = vadd.f32 0.0, %v175
    %v177 = vpop.f32.mrb[0].mxu0
    %178 = vmatprep.mubr.f32.mxu0 0.0
    %179 = vmatmul.mubr.f32.gmra.mrb[0].mxu0 %v107
    %v180 = vpop.f32.mrb[0].mxu0
    %v181 = vadd.f32 0.0, %v180
    %v182 = vpop.f32.mrb[0].mxu0
    %183 = vdwg.mxu0
    %v184 = vld [vmem:[%s1] sm:$0x3]
    %v185 = vld [vmem:[%s5] sm:$0xff]
    %v186 = vld [vmem:[%s5 + $0x8] sm:$0xff]
    %v187 = vld [vmem:[#allocation3] sm:$0x1]
    %v189 = vlaneseq
    %v190 = vshrl.u32 %v189, 7
    %v191 = vsub.s32 0, %v190
    %v192 = vrot.slane %v187, %v191
    %v195 = vsel %vm102, %v184, 0
    %197 = vmatprep.subr.mxu0 0.0
    %198 = vmatpush1.msra.mxu0 %v185
    %199 = vmatprep.subr.mxu0 0.0
    %200 = vmatpush1.msra.mxu0 %v186
    %201 = vmatprep.subr.mxu0 0.0
    %202 = vmatpush1.msra.mxu0 0.0
    %203 = vmatprep.subr.mxu0 0.0
    %204 = vmatpush1.msra.mxu0 0.0
    %205 = vmatprep.subr.mxu0 0.0
    %206 = vmatpush1.msra.mxu0 0.0
    %207 = vmatprep.subr.mxu0 0.0
    %208 = vmatpush1.msra.mxu0 0.0
    %209 = vmatprep.subr.mxu0 0.0
    %210 = vmatpush1.msra.mxu0 0.0
    %211 = vmatprep.subr.mxu0 0.0
    %212 = vmatpush1.msra.mxu0 0.0
    %213 = vmatprep.subr.mxu0 0.0
    %214 = vmatpush1.msra.mxu0 0.0
    %215 = vmatprep.subr.mxu0 0.0
    %216 = vmatpush1.msra.mxu0 0.0
    %217 = vmatprep.subr.mxu0 0.0
    %218 = vmatpush1.msra.mxu0 0.0
    %219 = vmatprep.subr.mxu0 0.0
    %220 = vmatpush1.msra.mxu0 0.0
    %221 = vmatprep.subr.mxu0 0.0
    %222 = vmatpush1.msra.mxu0 0.0
    %223 = vmatprep.subr.mxu0 0.0
    %224 = vmatpush1.msra.mxu0 0.0
    %225 = vmatprep.subr.mxu0 0.0
    %226 = vmatpush1.msra.mxu0 0.0
    %227 = vmatprep.subr.mxu0 0.0
    %228 = vmatpush1.msra.mxu0 0.0
    %229 = vmatprep.subr.mxu0 0.0
    %230 = vmatpush1.msra.mxu0 0.0
    %231 = vmatprep.subr.mxu0 0.0
    %232 = vmatpush1.msra.mxu0 0.0
    %233 = vmatprep.subr.mxu0 0.0
    %234 = vmatpush1.msra.mxu0 0.0
    %235 = vmatprep.subr.mxu0 0.0
    %236 = vmatpush1.msra.mxu0 0.0
    %237 = vmatprep.subr.mxu0 0.0
    %238 = vmatpush1.msra.mxu0 0.0
    %239 = vmatprep.subr.mxu0 0.0
    %240 = vmatpush1.msra.mxu0 0.0
    %241 = vmatprep.subr.mxu0 0.0
    %242 = vmatpush1.msra.mxu0 0.0
    %243 = vmatprep.subr.mxu0 0.0
    %244 = vmatpush1.msra.mxu0 0.0
    %245 = vmatprep.subr.mxu0 0.0
    %246 = vmatpush1.msra.mxu0 0.0
    %247 = vmatprep.subr.mxu0 0.0
    %248 = vmatpush1.msra.mxu0 0.0
    %249 = vmatprep.subr.mxu0 0.0
    %250 = vmatpush1.msra.mxu0 0.0
    %251 = vmatprep.subr.mxu0 0.0
    %252 = vmatpush1.msra.mxu0 0.0
    %253 = vmatprep.subr.mxu0 0.0
    %254 = vmatpush1.msra.mxu0 0.0
    %255 = vmatprep.subr.mxu0 0.0
    %256 = vmatpush1.msra.mxu0 0.0
    %257 = vmatprep.subr.mxu0 0.0
    %258 = vmatpush1.msra.mxu0 0.0
    %259 = vmatprep.subr.mxu0 0.0
    %260 = vmatpush1.msra.mxu0 0.0
    %261 = vmatprep.mubr.f32.mxu0 0.0
    %262 = vmatmul.mubr.f32.gmra.mrb[0].mxu0 %v195
    %v263 = vpop.f32.mrb[0].mxu0
    %v264 = vadd.f32 %v192, %v263
    %v265 = vpop.f32.mrb[0].mxu0
    %266 = vdwg.mxu0
    %v267 = vld [vmem:[%s6] sm:$0xff]
    %v268 = vld [vmem:[%s6 + $0x8] sm:$0xff]
    %v269 = vld [vmem:[%s6 + $0x10] sm:$0xff]
    %v270 = vld [vmem:[%s6 + $0x18] sm:$0xff]
    %v271 = vld [vmem:[%s2] sm:$0x3]
    %v272 = vld [vmem:[%s3] sm:$0x3]
    %v273 = vadd.f32 %v176, %v264
    %vm274 = vcmask 261120
    %v276 = vsel %vm274, %v271, 0
    %278 = vmatprep.subr.mxu0 0.0
    %279 = vmatpush1.msra.mxu0 %v267
    %280 = vmatprep.subr.mxu0 0.0
    %281 = vmatpush1.msra.mxu0 %v268
    %282 = vmatprep.subr.mxu0 0.0
    %283 = vmatpush1.msra.mxu0 %v269
    %284 = vmatprep.subr.mxu0 0.0
    %285 = vmatpush1.msra.mxu0 %v270
    %286 = vmatprep.subr.mxu0 0.0
    %287 = vmatpush1.msra.mxu0 0.0
    %288 = vmatprep.subr.mxu0 0.0
    %289 = vmatpush1.msra.mxu0 0.0
    %290 = vmatprep.subr.mxu0 0.0
    %291 = vmatpush1.msra.mxu0 0.0
    %292 = vmatprep.subr.mxu0 0.0
    %293 = vmatpush1.msra.mxu0 0.0
    %294 = vmatprep.subr.mxu0 0.0
    %295 = vmatpush1.msra.mxu0 0.0
    %296 = vmatprep.subr.mxu0 0.0
    %297 = vmatpush1.msra.mxu0 0.0
    %298 = vmatprep.subr.mxu0 0.0
    %299 = vmatpush1.msra.mxu0 0.0
    %300 = vmatprep.subr.mxu0 0.0
    %301 = vmatpush1.msra.mxu0 0.0
    %302 = vmatprep.subr.mxu0 0.0
    %303 = vmatpush1.msra.mxu0 0.0
    %304 = vmatprep.subr.mxu0 0.0
    %305 = vmatpush1.msra.mxu0 0.0
    %306 = vmatprep.subr.mxu0 0.0
    %307 = vmatpush1.msra.mxu0 0.0
    %308 = vmatprep.subr.mxu0 0.0
    %309 = vmatpush1.msra.mxu0 0.0
    %310 = vmatprep.subr.mxu0 0.0
    %311 = vmatpush1.msra.mxu0 0.0
    %312 = vmatprep.subr.mxu0 0.0
    %313 = vmatpush1.msra.mxu0 0.0
    %314 = vmatprep.subr.mxu0 0.0
    %315 = vmatpush1.msra.mxu0 0.0
    %316 = vmatprep.subr.mxu0 0.0
    %317 = vmatpush1.msra.mxu0 0.0
    %318 = vmatprep.subr.mxu0 0.0
    %319 = vmatpush1.msra.mxu0 0.0
    %320 = vmatprep.subr.mxu0 0.0
    %321 = vmatpush1.msra.mxu0 0.0
    %322 = vmatprep.subr.mxu0 0.0
    %323 = vmatpush1.msra.mxu0 0.0
    %324 = vmatprep.subr.mxu0 0.0
    %325 = vmatpush1.msra.mxu0 0.0
    %326 = vmatprep.subr.mxu0 0.0
    %327 = vmatpush1.msra.mxu0 0.0
    %328 = vmatprep.subr.mxu0 0.0
    %329 = vmatpush1.msra.mxu0 0.0
    %330 = vmatprep.subr.mxu0 0.0
    %331 = vmatpush1.msra.mxu0 0.0
    %332 = vmatprep.subr.mxu0 0.0
    %333 = vmatpush1.msra.mxu0 0.0
    %334 = vmatprep.subr.mxu0 0.0
    %335 = vmatpush1.msra.mxu0 0.0
    %336 = vmatprep.subr.mxu0 0.0
    %337 = vmatpush1.msra.mxu0 0.0
    %338 = vmatprep.subr.mxu0 0.0
    %339 = vmatpush1.msra.mxu0 0.0
    %340 = vmatprep.subr.mxu0 0.0
    %341 = vmatpush1.msra.mxu0 0.0
    %342 = vmatprep.mubr.f32.mxu0 0.0
    %343 = vmatmul.mubr.f32.gmra.mrb[0].mxu0 %v276
    %v344 = vpop.f32.mrb[0].mxu0
    %v345 = vadd.f32 0.0, %v344
    %v346 = vpop.f32.mrb[0].mxu0
    %347 = vdwg.mxu0
    %v348 = vadd.f32 %v273, %v345
    %v349 = vsub.f32 0.0, %v348
    %v350 = vmul.f32 %v349, 1.442695
    %v351 = vpow.pop %v350
    %v352 = vadd.f32 %v351, 1.0
    %v353 = vrcp.pop %v352
    %v354 = vmul.f32 1.0, %v353
    %v355 = vtanh.pop %v348
    %357 = vrot.lane.b32.xlu0 %v272, 32
    %v358 = vpop.permute.xlu0 %357
    %v360 = vmul.f32 %v354, %v358
    %362 = vrot.lane.b32.xlu0 %v355, 64
    %v363 = vpop.permute.xlu0 %362
    %v365 = vmul.f32 %v354, %v363
    %367 = vrot.lane.b32.xlu0 %v365, 32
    %v368 = vpop.permute.xlu0 %367
    %v370 = vadd.f32 %v360, %v368
    %v371 = vtanh.pop %v370
    %373 = vrot.lane.b32.xlu0 %v371, 64
    %v374 = vpop.permute.xlu0 %373
    %v376 = vmul.f32 %v354, %v374
    %378 = vrot.lane.b32.xlu0 %v376, 32
    %v379 = vpop.permute.xlu0 %378
    %vm381 = vcmask 254976
    %382 = vst.msk [vmem:[#allocation2] sm:$0x3] %vm381, %v379
    %v384 = vrot.slane %v264, 6
    %v386 = vadd.f32 %v176, %v384
    %v387 = vsel %vm274, %v379, 0
    %389 = vmatprep.subr.mxu0 0.0
    %390 = vmatpush1.msra.mxu0 %v267
    %391 = vmatprep.subr.mxu0 0.0
    %392 = vmatpush1.msra.mxu0 %v268
    %393 = vmatprep.subr.mxu0 0.0
    %394 = vmatpush1.msra.mxu0 %v269
    %395 = vmatprep.subr.mxu0 0.0
    %396 = vmatpush1.msra.mxu0 %v270
    %397 = vmatprep.subr.mxu0 0.0
    %398 = vmatpush1.msra.mxu0 0.0
    %399 = vmatprep.subr.mxu0 0.0
    %400 = vmatpush1.msra.mxu0 0.0
    %401 = vmatprep.subr.mxu0 0.0
    %402 = vmatpush1.msra.mxu0 0.0
    %403 = vmatprep.subr.mxu0 0.0
    %404 = vmatpush1.msra.mxu0 0.0
    %405 = vmatprep.subr.mxu0 0.0
    %406 = vmatpush1.msra.mxu0 0.0
    %407 = vmatprep.subr.mxu0 0.0
    %408 = vmatpush1.msra.mxu0 0.0
    %409 = vmatprep.subr.mxu0 0.0
    %410 = vmatpush1.msra.mxu0 0.0
    %411 = vmatprep.subr.mxu0 0.0
    %412 = vmatpush1.msra.mxu0 0.0
    %413 = vmatprep.subr.mxu0 0.0
    %414 = vmatpush1.msra.mxu0 0.0
    %415 = vmatprep.subr.mxu0 0.0
    %416 = vmatpush1.msra.mxu0 0.0
    %417 = vmatprep.subr.mxu0 0.0
    %418 = vmatpush1.msra.mxu0 0.0
    %419 = vmatprep.subr.mxu0 0.0
    %420 = vmatpush1.msra.mxu0 0.0
    %421 = vmatprep.subr.mxu0 0.0
    %422 = vmatpush1.msra.mxu0 0.0
    %423 = vmatprep.subr.mxu0 0.0
    %424 = vmatpush1.msra.mxu0 0.0
    %425 = vmatprep.subr.mxu0 0.0
    %426 = vmatpush1.msra.mxu0 0.0
    %427 = vmatprep.subr.mxu0 0.0
    %428 = vmatpush1.msra.mxu0 0.0
    %429 = vmatprep.subr.mxu0 0.0
    %430 = vmatpush1.msra.mxu0 0.0
    %431 = vmatprep.subr.mxu0 0.0
    %432 = vmatpush1.msra.mxu0 0.0
    %433 = vmatprep.subr.mxu0 0.0
    %434 = vmatpush1.msra.mxu0 0.0
    %435 = vmatprep.subr.mxu0 0.0
    %436 = vmatpush1.msra.mxu0 0.0
    %437 = vmatprep.subr.mxu0 0.0
    %438 = vmatpush1.msra.mxu0 0.0
    %439 = vmatprep.subr.mxu0 0.0
    %440 = vmatpush1.msra.mxu0 0.0
    %441 = vmatprep.subr.mxu0 0.0
    %442 = vmatpush1.msra.mxu0 0.0
    %443 = vmatprep.subr.mxu0 0.0
    %444 = vmatpush1.msra.mxu0 0.0
    %445 = vmatprep.subr.mxu0 0.0
    %446 = vmatpush1.msra.mxu0 0.0
    %447 = vmatprep.subr.mxu0 0.0
    %448 = vmatpush1.msra.mxu0 0.0
    %449 = vmatprep.subr.mxu0 0.0
    %450 = vmatpush1.msra.mxu0 0.0
    %451 = vmatprep.subr.mxu0 0.0
    %452 = vmatpush1.msra.mxu0 0.0
    %453 = vmatprep.mubr.f32.mxu0 0.0
    %454 = vmatmul.mubr.f32.gmra.mrb[0].mxu0 %v387
    %v455 = vpop.f32.mrb[0].mxu0
    %v456 = vadd.f32 0.0, %v455
    %v457 = vpop.f32.mrb[0].mxu0
    %458 = vdwg.mxu0
    %v460 = vrot.slane %v456, 6
    %v462 = vadd.f32 %v386, %v460
    %v463 = vsub.f32 0.0, %v462
    %v464 = vmul.f32 %v463, 1.442695
    %v465 = vpow.pop %v464
    %v466 = vadd.f32 %v465, 1.0
    %v467 = vrcp.pop %v466
    %v468 = vmul.f32 1.0, %v467
    %v469 = vtanh.pop %v462
    %v471 = vrot.slane %v370, 6
    %v473 = vmul.f32 %v468, %v471
    %475 = vrot.lane.b32.xlu0 %v469, 64
    %v476 = vpop.permute.xlu0 %475
    %v478 = vmul.f32 %v468, %v476
    %480 = vrot.lane.b32.xlu0 %v478, 32
    %v481 = vpop.permute.xlu0 %480
    %v483 = vadd.f32 %v473, %v481
    %v484 = vtanh.pop %v483
    %486 = vrot.lane.b32.xlu0 %v484, 64
    %v487 = vpop.permute.xlu0 %486
    %v489 = vmul.f32 %v468, %v487
    %491 = vrot.lane.b32.xlu0 %v489, 32
    %v492 = vpop.permute.xlu0 %491
    %vm494 = vcmask 257026
    %495 = vst.msk [vmem:[#allocation2] sm:$0xc] %vm494, %v492
    %v496 = vrot.slane %v264, 4
    %v498 = vadd.f32 %v176, %v496
    %v499 = vrot.slane %v489, 2
    %500 = vrot.lane.b32.xlu0 %v499, 32
    %v501 = vpop.permute.xlu0 %500
    %v502 = vsel %vm274, %v501, 0
    %504 = vmatprep.subr.mxu0 0.0
    %505 = vmatpush1.msra.mxu0 %v267
    %506 = vmatprep.subr.mxu0 0.0
    %507 = vmatpush1.msra.mxu0 %v268
    %508 = vmatprep.subr.mxu0 0.0
    %509 = vmatpush1.msra.mxu0 %v269
    %510 = vmatprep.subr.mxu0 0.0
    %511 = vmatpush1.msra.mxu0 %v270
    %512 = vmatprep.subr.mxu0 0.0
    %513 = vmatpush1.msra.mxu0 0.0
    %514 = vmatprep.subr.mxu0 0.0
    %515 = vmatpush1.msra.mxu0 0.0
    %516 = vmatprep.subr.mxu0 0.0
    %517 = vmatpush1.msra.mxu0 0.0
    %518 = vmatprep.subr.mxu0 0.0
    %519 = vmatpush1.msra.mxu0 0.0
    %520 = vmatprep.subr.mxu0 0.0
    %521 = vmatpush1.msra.mxu0 0.0
    %522 = vmatprep.subr.mxu0 0.0
    %523 = vmatpush1.msra.mxu0 0.0
    %524 = vmatprep.subr.mxu0 0.0
    %525 = vmatpush1.msra.mxu0 0.0
    %526 = vmatprep.subr.mxu0 0.0
    %527 = vmatpush1.msra.mxu0 0.0
    %528 = vmatprep.subr.mxu0 0.0
    %529 = vmatpush1.msra.mxu0 0.0
    %530 = vmatprep.subr.mxu0 0.0
    %531 = vmatpush1.msra.mxu0 0.0
    %532 = vmatprep.subr.mxu0 0.0
    %533 = vmatpush1.msra.mxu0 0.0
    %534 = vmatprep.subr.mxu0 0.0
    %535 = vmatpush1.msra.mxu0 0.0
    %536 = vmatprep.subr.mxu0 0.0
    %537 = vmatpush1.msra.mxu0 0.0
    %538 = vmatprep.subr.mxu0 0.0
    %539 = vmatpush1.msra.mxu0 0.0
    %540 = vmatprep.subr.mxu0 0.0
    %541 = vmatpush1.msra.mxu0 0.0
    %542 = vmatprep.subr.mxu0 0.0
    %543 = vmatpush1.msra.mxu0 0.0
    %544 = vmatprep.subr.mxu0 0.0
    %545 = vmatpush1.msra.mxu0 0.0
    %546 = vmatprep.subr.mxu0 0.0
    %547 = vmatpush1.msra.mxu0 0.0
    %548 = vmatprep.subr.mxu0 0.0
    %549 = vmatpush1.msra.mxu0 0.0
    %550 = vmatprep.subr.mxu0 0.0
    %551 = vmatpush1.msra.mxu0 0.0
    %552 = vmatprep.subr.mxu0 0.0
    %553 = vmatpush1.msra.mxu0 0.0
    %554 = vmatprep.subr.mxu0 0.0
    %555 = vmatpush1.msra.mxu0 0.0
    %556 = vmatprep.subr.mxu0 0.0
    %557 = vmatpush1.msra.mxu0 0.0
    %558 = vmatprep.subr.mxu0 0.0
    %559 = vmatpush1.msra.mxu0 0.0
    %560 = vmatprep.subr.mxu0 0.0
    %561 = vmatpush1.msra.mxu0 0.0
    %562 = vmatprep.subr.mxu0 0.0
    %563 = vmatpush1.msra.mxu0 0.0
    %564 = vmatprep.subr.mxu0 0.0
    %565 = vmatpush1.msra.mxu0 0.0
    %566 = vmatprep.subr.mxu0 0.0
    %567 = vmatpush1.msra.mxu0 0.0
    %568 = vmatprep.mubr.f32.mxu0 0.0
    %569 = vmatmul.mubr.f32.gmra.mrb[0].mxu0 %v502
    %v570 = vpop.f32.mrb[0].mxu0
    %v571 = vadd.f32 0.0, %v570
    %v572 = vpop.f32.mrb[0].mxu0
    %573 = vdwg.mxu0
    %v575 = vrot.slane %v571, 4
    %v577 = vadd.f32 %v498, %v575
    %v578 = vsub.f32 0.0, %v577
    %v579 = vmul.f32 %v578, 1.442695
    %v580 = vpow.pop %v579
    %v581 = vadd.f32 %v580, 1.0
    %v582 = vrcp.pop %v581
    %v583 = vmul.f32 1.0, %v582
    %v584 = vtanh.pop %v577
    %v586 = vrot.slane %v483, 6
    %v588 = vmul.f32 %v583, %v586
    %590 = vrot.lane.b32.xlu0 %v584, 64
    %v591 = vpop.permute.xlu0 %590
    %v593 = vmul.f32 %v583, %v591
    %595 = vrot.lane.b32.xlu0 %v593, 32
    %v596 = vpop.permute.xlu0 %595
    %v598 = vadd.f32 %v588, %v596
    %v599 = vtanh.pop %v598
    %601 = vrot.lane.b32.xlu0 %v599, 64
    %v602 = vpop.permute.xlu0 %601
    %v604 = vmul.f32 %v583, %v602
    %606 = vrot.lane.b32.xlu0 %v604, 32
    %v607 = vpop.permute.xlu0 %606
    %vm609 = vcmask 259076
    %610 = vst.msk [vmem:[#allocation2] sm:$0x30] %vm609, %v607
    %v611 = vrot.slane %v264, 2
    %v613 = vadd.f32 %v176, %v611
    %v614 = vrot.slane %v604, 4
    %615 = vrot.lane.b32.xlu0 %v614, 32
    %v616 = vpop.permute.xlu0 %615
    %v617 = vsel %vm274, %v616, 0
    %619 = vmatprep.subr.mxu0 0.0
    %620 = vmatpush1.msra.mxu0 %v267
    %621 = vmatprep.subr.mxu0 0.0
    %622 = vmatpush1.msra.mxu0 %v268
    %623 = vmatprep.subr.mxu0 0.0
    %624 = vmatpush1.msra.mxu0 %v269
    %625 = vmatprep.subr.mxu0 0.0
    %626 = vmatpush1.msra.mxu0 %v270
    %627 = vmatprep.subr.mxu0 0.0
    %628 = vmatpush1.msra.mxu0 0.0
    %629 = vmatprep.subr.mxu0 0.0
    %630 = vmatpush1.msra.mxu0 0.0
    %631 = vmatprep.subr.mxu0 0.0
    %632 = vmatpush1.msra.mxu0 0.0
    %633 = vmatprep.subr.mxu0 0.0
    %634 = vmatpush1.msra.mxu0 0.0
    %635 = vmatprep.subr.mxu0 0.0
    %636 = vmatpush1.msra.mxu0 0.0
    %637 = vmatprep.subr.mxu0 0.0
    %638 = vmatpush1.msra.mxu0 0.0
    %639 = vmatprep.subr.mxu0 0.0
    %640 = vmatpush1.msra.mxu0 0.0
    %641 = vmatprep.subr.mxu0 0.0
    %642 = vmatpush1.msra.mxu0 0.0
    %643 = vmatprep.subr.mxu0 0.0
    %644 = vmatpush1.msra.mxu0 0.0
    %645 = vmatprep.subr.mxu0 0.0
    %646 = vmatpush1.msra.mxu0 0.0
    %647 = vmatprep.subr.mxu0 0.0
    %648 = vmatpush1.msra.mxu0 0.0
    %649 = vmatprep.subr.mxu0 0.0
    %650 = vmatpush1.msra.mxu0 0.0
    %651 = vmatprep.subr.mxu0 0.0
    %652 = vmatpush1.msra.mxu0 0.0
    %653 = vmatprep.subr.mxu0 0.0
    %654 = vmatpush1.msra.mxu0 0.0
    %655 = vmatprep.subr.mxu0 0.0
    %656 = vmatpush1.msra.mxu0 0.0
    %657 = vmatprep.subr.mxu0 0.0
    %658 = vmatpush1.msra.mxu0 0.0
    %659 = vmatprep.subr.mxu0 0.0
    %660 = vmatpush1.msra.mxu0 0.0
    %661 = vmatprep.subr.mxu0 0.0
    %662 = vmatpush1.msra.mxu0 0.0
    %663 = vmatprep.subr.mxu0 0.0
    %664 = vmatpush1.msra.mxu0 0.0
    %665 = vmatprep.subr.mxu0 0.0
    %666 = vmatpush1.msra.mxu0 0.0
    %667 = vmatprep.subr.mxu0 0.0
    %668 = vmatpush1.msra.mxu0 0.0
    %669 = vmatprep.subr.mxu0 0.0
    %670 = vmatpush1.msra.mxu0 0.0
    %671 = vmatprep.subr.mxu0 0.0
    %672 = vmatpush1.msra.mxu0 0.0
    %673 = vmatprep.subr.mxu0 0.0
    %674 = vmatpush1.msra.mxu0 0.0
    %675 = vmatprep.subr.mxu0 0.0
    %676 = vmatpush1.msra.mxu0 0.0
    %677 = vmatprep.subr.mxu0 0.0
    %678 = vmatpush1.msra.mxu0 0.0
    %679 = vmatprep.subr.mxu0 0.0
    %680 = vmatpush1.msra.mxu0 0.0
    %681 = vmatprep.subr.mxu0 0.0
    %682 = vmatpush1.msra.mxu0 0.0
    %683 = vmatprep.mubr.f32.mxu0 0.0
    %684 = vmatmul.mubr.f32.gmra.mrb[0].mxu0 %v617
    %v685 = vpop.f32.mrb[0].mxu0
    %v686 = vadd.f32 0.0, %v685
    %v687 = vpop.f32.mrb[0].mxu0
    %688 = vdwg.mxu0
    %v690 = vrot.slane %v686, 2
    %v692 = vadd.f32 %v613, %v690
    %v693 = vsub.f32 0.0, %v692
    %v694 = vmul.f32 %v693, 1.442695
    %v695 = vpow.pop %v694
    %v696 = vadd.f32 %v695, 1.0
    %v697 = vrcp.pop %v696
    %v698 = vmul.f32 1.0, %v697
    %v699 = vtanh.pop %v692
    %v701 = vrot.slane %v598, 6
    %v703 = vmul.f32 %v698, %v701
    %705 = vrot.lane.b32.xlu0 %v699, 64
    %v706 = vpop.permute.xlu0 %705
    %v708 = vmul.f32 %v698, %v706
    %710 = vrot.lane.b32.xlu0 %v708, 32
    %v711 = vpop.permute.xlu0 %710
    %v713 = vadd.f32 %v703, %v711
    %v714 = vtanh.pop %v713
    %716 = vrot.lane.b32.xlu0 %v714, 64
    %v717 = vpop.permute.xlu0 %716
    %v719 = vmul.f32 %v698, %v717
    %721 = vrot.lane.b32.xlu0 %v719, 32
    %v722 = vpop.permute.xlu0 %721
    %vm724 = vcmask 261126
    %725 = vst.msk [vmem:[#allocation2] sm:$0xc0] %vm724, %v722
    %v726 = vadd.f32 %v181, %v264
    %v727 = vrot.slane %v719, 6
    %728 = vrot.lane.b32.xlu0 %v727, 32
    %v729 = vpop.permute.xlu0 %728
    %v730 = vsel %vm274, %v729, 0
    %732 = vmatprep.subr.mxu0 0.0
    %733 = vmatpush1.msra.mxu0 %v267
    %734 = vmatprep.subr.mxu0 0.0
    %735 = vmatpush1.msra.mxu0 %v268
    %736 = vmatprep.subr.mxu0 0.0
    %737 = vmatpush1.msra.mxu0 %v269
    %738 = vmatprep.subr.mxu0 0.0
    %739 = vmatpush1.msra.mxu0 %v270
    %740 = vmatprep.subr.mxu0 0.0
    %741 = vmatpush1.msra.mxu0 0.0
    %742 = vmatprep.subr.mxu0 0.0
    %743 = vmatpush1.msra.mxu0 0.0
    %744 = vmatprep.subr.mxu0 0.0
    %745 = vmatpush1.msra.mxu0 0.0
    %746 = vmatprep.subr.mxu0 0.0
    %747 = vmatpush1.msra.mxu0 0.0
    %748 = vmatprep.subr.mxu0 0.0
    %749 = vmatpush1.msra.mxu0 0.0
    %750 = vmatprep.subr.mxu0 0.0
    %751 = vmatpush1.msra.mxu0 0.0
    %752 = vmatprep.subr.mxu0 0.0
    %753 = vmatpush1.msra.mxu0 0.0
    %754 = vmatprep.subr.mxu0 0.0
    %755 = vmatpush1.msra.mxu0 0.0
    %756 = vmatprep.subr.mxu0 0.0
    %757 = vmatpush1.msra.mxu0 0.0
    %758 = vmatprep.subr.mxu0 0.0
    %759 = vmatpush1.msra.mxu0 0.0
    %760 = vmatprep.subr.mxu0 0.0
    %761 = vmatpush1.msra.mxu0 0.0
    %762 = vmatprep.subr.mxu0 0.0
    %763 = vmatpush1.msra.mxu0 0.0
    %764 = vmatprep.subr.mxu0 0.0
    %765 = vmatpush1.msra.mxu0 0.0
    %766 = vmatprep.subr.mxu0 0.0
    %767 = vmatpush1.msra.mxu0 0.0
    %768 = vmatprep.subr.mxu0 0.0
    %769 = vmatpush1.msra.mxu0 0.0
    %770 = vmatprep.subr.mxu0 0.0
    %771 = vmatpush1.msra.mxu0 0.0
    %772 = vmatprep.subr.mxu0 0.0
    %773 = vmatpush1.msra.mxu0 0.0
    %774 = vmatprep.subr.mxu0 0.0
    %775 = vmatpush1.msra.mxu0 0.0
    %776 = vmatprep.subr.mxu0 0.0
    %777 = vmatpush1.msra.mxu0 0.0
    %778 = vmatprep.subr.mxu0 0.0
    %779 = vmatpush1.msra.mxu0 0.0
    %780 = vmatprep.subr.mxu0 0.0
    %781 = vmatpush1.msra.mxu0 0.0
    %782 = vmatprep.subr.mxu0 0.0
    %783 = vmatpush1.msra.mxu0 0.0
    %784 = vmatprep.subr.mxu0 0.0
    %785 = vmatpush1.msra.mxu0 0.0
    %786 = vmatprep.subr.mxu0 0.0
    %787 = vmatpush1.msra.mxu0 0.0
    %788 = vmatprep.subr.mxu0 0.0
    %789 = vmatpush1.msra.mxu0 0.0
    %790 = vmatprep.subr.mxu0 0.0
    %791 = vmatpush1.msra.mxu0 0.0
    %792 = vmatprep.subr.mxu0 0.0
    %793 = vmatpush1.msra.mxu0 0.0
    %794 = vmatprep.subr.mxu0 0.0
    %795 = vmatpush1.msra.mxu0 0.0
    %796 = vmatprep.mubr.f32.mxu0 0.0
    %797 = vmatmul.mubr.f32.gmra.mrb[0].mxu0 %v730
    %v798 = vpop.f32.mrb[0].mxu0
    %v799 = vadd.f32 0.0, %v798
    %v800 = vpop.f32.mrb[0].mxu0
    %801 = vdwg.mxu0
    %v802 = vadd.f32 %v726, %v799
    %v803 = vsub.f32 0.0, %v802
    %v804 = vmul.f32 %v803, 1.442695
    %v805 = vpow.pop %v804
    %v806 = vadd.f32 %v805, 1.0
    %v807 = vrcp.pop %v806
    %v808 = vmul.f32 1.0, %v807
    %v809 = vtanh.pop %v802
    %v811 = vrot.slane %v713, 6
    %v813 = vmul.f32 %v808, %v811
    %815 = vrot.lane.b32.xlu0 %v809, 64
    %v816 = vpop.permute.xlu0 %815
    %v818 = vmul.f32 %v808, %v816
    %820 = vrot.lane.b32.xlu0 %v818, 32
    %v821 = vpop.permute.xlu0 %820
    %v823 = vadd.f32 %v813, %v821
    %v824 = vtanh.pop %v823
    %826 = vrot.lane.b32.xlu0 %v824, 64
    %v827 = vpop.permute.xlu0 %826
    %v829 = vmul.f32 %v808, %v827
    %831 = vrot.lane.b32.xlu0 %v829, 32
    %v832 = vpop.permute.xlu0 %831
    %834 = vst.msk [vmem:[#allocation2 + $0x8] sm:$0x3] %vm381, %v832
    %v835 = vadd.f32 %v181, %v384
    %v836 = vsel %vm274, %v832, 0
    %838 = vmatprep.subr.mxu0 0.0
    %839 = vmatpush1.msra.mxu0 %v267
    %840 = vmatprep.subr.mxu0 0.0
    %841 = vmatpush1.msra.mxu0 %v268
    %842 = vmatprep.subr.mxu0 0.0
    %843 = vmatpush1.msra.mxu0 %v269
    %844 = vmatprep.subr.mxu0 0.0
    %845 = vmatpush1.msra.mxu0 %v270
    %846 = vmatprep.subr.mxu0 0.0
    %847 = vmatpush1.msra.mxu0 0.0
    %848 = vmatprep.subr.mxu0 0.0
    %849 = vmatpush1.msra.mxu0 0.0
    %850 = vmatprep.subr.mxu0 0.0
    %851 = vmatpush1.msra.mxu0 0.0
    %852 = vmatprep.subr.mxu0 0.0
    %853 = vmatpush1.msra.mxu0 0.0
    %854 = vmatprep.subr.mxu0 0.0
    %855 = vmatpush1.msra.mxu0 0.0
    %856 = vmatprep.subr.mxu0 0.0
    %857 = vmatpush1.msra.mxu0 0.0
    %858 = vmatprep.subr.mxu0 0.0
    %859 = vmatpush1.msra.mxu0 0.0
    %860 = vmatprep.subr.mxu0 0.0
    %861 = vmatpush1.msra.mxu0 0.0
    %862 = vmatprep.subr.mxu0 0.0
    %863 = vmatpush1.msra.mxu0 0.0
    %864 = vmatprep.subr.mxu0 0.0
    %865 = vmatpush1.msra.mxu0 0.0
    %866 = vmatprep.subr.mxu0 0.0
    %867 = vmatpush1.msra.mxu0 0.0
    %868 = vmatprep.subr.mxu0 0.0
    %869 = vmatpush1.msra.mxu0 0.0
    %870 = vmatprep.subr.mxu0 0.0
    %871 = vmatpush1.msra.mxu0 0.0
    %872 = vmatprep.subr.mxu0 0.0
    %873 = vmatpush1.msra.mxu0 0.0
    %874 = vmatprep.subr.mxu0 0.0
    %875 = vmatpush1.msra.mxu0 0.0
    %876 = vmatprep.subr.mxu0 0.0
    %877 = vmatpush1.msra.mxu0 0.0
    %878 = vmatprep.subr.mxu0 0.0
    %879 = vmatpush1.msra.mxu0 0.0
    %880 = vmatprep.subr.mxu0 0.0
    %881 = vmatpush1.msra.mxu0 0.0
    %882 = vmatprep.subr.mxu0 0.0
    %883 = vmatpush1.msra.mxu0 0.0
    %884 = vmatprep.subr.mxu0 0.0
    %885 = vmatpush1.msra.mxu0 0.0
    %886 = vmatprep.subr.mxu0 0.0
    %887 = vmatpush1.msra.mxu0 0.0
    %888 = vmatprep.subr.mxu0 0.0
    %889 = vmatpush1.msra.mxu0 0.0
    %890 = vmatprep.subr.mxu0 0.0
    %891 = vmatpush1.msra.mxu0 0.0
    %892 = vmatprep.subr.mxu0 0.0
    %893 = vmatpush1.msra.mxu0 0.0
    %894 = vmatprep.subr.mxu0 0.0
    %895 = vmatpush1.msra.mxu0 0.0
    %896 = vmatprep.subr.mxu0 0.0
    %897 = vmatpush1.msra.mxu0 0.0
    %898 = vmatprep.subr.mxu0 0.0
    %899 = vmatpush1.msra.mxu0 0.0
    %900 = vmatprep.subr.mxu0 0.0
    %901 = vmatpush1.msra.mxu0 0.0
    %902 = vmatprep.mubr.f32.mxu0 0.0
    %903 = vmatmul.mubr.f32.gmra.mrb[0].mxu0 %v836
    %v904 = vpop.f32.mrb[0].mxu0
    %v905 = vadd.f32 0.0, %v904
    %v906 = vpop.f32.mrb[0].mxu0
    %907 = vdwg.mxu0
    %v909 = vrot.slane %v905, 6
    %v911 = vadd.f32 %v835, %v909
    %v912 = vsub.f32 0.0, %v911
    %v913 = vmul.f32 %v912, 1.442695
    %v914 = vpow.pop %v913
    %v915 = vadd.f32 %v914, 1.0
    %v916 = vrcp.pop %v915
    %v917 = vmul.f32 1.0, %v916
    %v918 = vtanh.pop %v911
    %v920 = vrot.slane %v823, 6
    %v922 = vmul.f32 %v917, %v920
    %924 = vrot.lane.b32.xlu0 %v918, 64
    %v925 = vpop.permute.xlu0 %924
    %v927 = vmul.f32 %v917, %v925
    %929 = vrot.lane.b32.xlu0 %v927, 32
    %v930 = vpop.permute.xlu0 %929
    %v932 = vadd.f32 %v922, %v930
    %v933 = vtanh.pop %v932
    %935 = vrot.lane.b32.xlu0 %v933, 64
    %v936 = vpop.permute.xlu0 %935
    %v938 = vmul.f32 %v917, %v936
    %940 = vrot.lane.b32.xlu0 %v938, 32
    %v941 = vpop.permute.xlu0 %940
    %943 = vst.msk [vmem:[#allocation2 + $0x8] sm:$0xc] %vm494, %v941
    %v944 = vadd.f32 %v181, %v496
    %v945 = vrot.slane %v938, 2
    %946 = vrot.lane.b32.xlu0 %v945, 32
    %v947 = vpop.permute.xlu0 %946
    %v948 = vsel %vm274, %v947, 0
    %950 = vmatprep.subr.mxu0 0.0
    %951 = vmatpush1.msra.mxu0 %v267
    %952 = vmatprep.subr.mxu0 0.0
    %953 = vmatpush1.msra.mxu0 %v268
    %954 = vmatprep.subr.mxu0 0.0
    %955 = vmatpush1.msra.mxu0 %v269
    %956 = vmatprep.subr.mxu0 0.0
    %957 = vmatpush1.msra.mxu0 %v270
    %958 = vmatprep.subr.mxu0 0.0
    %959 = vmatpush1.msra.mxu0 0.0
    %960 = vmatprep.subr.mxu0 0.0
    %961 = vmatpush1.msra.mxu0 0.0
    %962 = vmatprep.subr.mxu0 0.0
    %963 = vmatpush1.msra.mxu0 0.0
    %964 = vmatprep.subr.mxu0 0.0
    %965 = vmatpush1.msra.mxu0 0.0
    %966 = vmatprep.subr.mxu0 0.0
    %967 = vmatpush1.msra.mxu0 0.0
    %968 = vmatprep.subr.mxu0 0.0
    %969 = vmatpush1.msra.mxu0 0.0
    %970 = vmatprep.subr.mxu0 0.0
    %971 = vmatpush1.msra.mxu0 0.0
    %972 = vmatprep.subr.mxu0 0.0
    %973 = vmatpush1.msra.mxu0 0.0
    %974 = vmatprep.subr.mxu0 0.0
    %975 = vmatpush1.msra.mxu0 0.0
    %976 = vmatprep.subr.mxu0 0.0
    %977 = vmatpush1.msra.mxu0 0.0
    %978 = vmatprep.subr.mxu0 0.0
    %979 = vmatpush1.msra.mxu0 0.0
    %980 = vmatprep.subr.mxu0 0.0
    %981 = vmatpush1.msra.mxu0 0.0
    %982 = vmatprep.subr.mxu0 0.0
    %983 = vmatpush1.msra.mxu0 0.0
    %984 = vmatprep.subr.mxu0 0.0
    %985 = vmatpush1.msra.mxu0 0.0
    %986 = vmatprep.subr.mxu0 0.0
    %987 = vmatpush1.msra.mxu0 0.0
    %988 = vmatprep.subr.mxu0 0.0
    %989 = vmatpush1.msra.mxu0 0.0
    %990 = vmatprep.subr.mxu0 0.0
    %991 = vmatpush1.msra.mxu0 0.0
    %992 = vmatprep.subr.mxu0 0.0
    %993 = vmatpush1.msra.mxu0 0.0
    %994 = vmatprep.subr.mxu0 0.0
    %995 = vmatpush1.msra.mxu0 0.0
    %996 = vmatprep.subr.mxu0 0.0
    %997 = vmatpush1.msra.mxu0 0.0
    %998 = vmatprep.subr.mxu0 0.0
    %999 = vmatpush1.msra.mxu0 0.0
    %1000 = vmatprep.subr.mxu0 0.0
    %1001 = vmatpush1.msra.mxu0 0.0
    %1002 = vmatprep.subr.mxu0 0.0
    %1003 = vmatpush1.msra.mxu0 0.0
    %1004 = vmatprep.subr.mxu0 0.0
    %1005 = vmatpush1.msra.mxu0 0.0
    %1006 = vmatprep.subr.mxu0 0.0
    %1007 = vmatpush1.msra.mxu0 0.0
    %1008 = vmatprep.subr.mxu0 0.0
    %1009 = vmatpush1.msra.mxu0 0.0
    %1010 = vmatprep.subr.mxu0 0.0
    %1011 = vmatpush1.msra.mxu0 0.0
    %1012 = vmatprep.subr.mxu0 0.0
    %1013 = vmatpush1.msra.mxu0 0.0
    %1014 = vmatprep.mubr.f32.mxu0 0.0
    %1015 = vmatmul.mubr.f32.gmra.mrb[0].mxu0 %v948
    %v1016 = vpop.f32.mrb[0].mxu0
    %v1017 = vadd.f32 0.0, %v1016
    %v1018 = vpop.f32.mrb[0].mxu0
    %1019 = vdwg.mxu0
    %v1021 = vrot.slane %v1017, 4
    %v1023 = vadd.f32 %v944, %v1021
    %v1024 = vsub.f32 0.0, %v1023
    %v1025 = vmul.f32 %v1024, 1.442695
    %v1026 = vpow.pop %v1025
    %v1027 = vadd.f32 %v1026, 1.0
    %v1028 = vrcp.pop %v1027
    %v1029 = vmul.f32 1.0, %v1028
    %v1030 = vtanh.pop %v1023
    %v1032 = vrot.slane %v932, 6
    %v1034 = vmul.f32 %v1029, %v1032
    %1036 = vrot.lane.b32.xlu0 %v1030, 64
    %v1037 = vpop.permute.xlu0 %1036
    %v1039 = vmul.f32 %v1029, %v1037
    %1041 = vrot.lane.b32.xlu0 %v1039, 32
    %v1042 = vpop.permute.xlu0 %1041
    %v1044 = vadd.f32 %v1034, %v1042
    %v1045 = vtanh.pop %v1044
    %1047 = vrot.lane.b32.xlu0 %v1045, 64
    %v1048 = vpop.permute.xlu0 %1047
    %v1050 = vmul.f32 %v1029, %v1048
    %1052 = vrot.lane.b32.xlu0 %v1050, 32
    %v1053 = vpop.permute.xlu0 %1052
    %1055 = vst.msk [vmem:[#allocation2 + $0x8] sm:$0x30] %vm609, %v1053
    %v1056 = vadd.f32 %v181, %v611
    %v1057 = vrot.slane %v1050, 4
    %1058 = vrot.lane.b32.xlu0 %v1057, 32
    %v1059 = vpop.permute.xlu0 %1058
    %v1060 = vsel %vm274, %v1059, 0
    %1062 = vmatprep.subr.mxu0 0.0
    %1063 = vmatpush1.msra.mxu0 %v267
    %1064 = vmatprep.subr.mxu0 0.0
    %1065 = vmatpush1.msra.mxu0 %v268
    %1066 = vmatprep.subr.mxu0 0.0
    %1067 = vmatpush1.msra.mxu0 %v269
    %1068 = vmatprep.subr.mxu0 0.0
    %1069 = vmatpush1.msra.mxu0 %v270
    %1070 = vmatprep.subr.mxu0 0.0
    %1071 = vmatpush1.msra.mxu0 0.0
    %1072 = vmatprep.subr.mxu0 0.0
    %1073 = vmatpush1.msra.mxu0 0.0
    %1074 = vmatprep.subr.mxu0 0.0
    %1075 = vmatpush1.msra.mxu0 0.0
    %1076 = vmatprep.subr.mxu0 0.0
    %1077 = vmatpush1.msra.mxu0 0.0
    %1078 = vmatprep.subr.mxu0 0.0
    %1079 = vmatpush1.msra.mxu0 0.0
    %1080 = vmatprep.subr.mxu0 0.0
    %1081 = vmatpush1.msra.mxu0 0.0
    %1082 = vmatprep.subr.mxu0 0.0
    %1083 = vmatpush1.msra.mxu0 0.0
    %1084 = vmatprep.subr.mxu0 0.0
    %1085 = vmatpush1.msra.mxu0 0.0
    %1086 = vmatprep.subr.mxu0 0.0
    %1087 = vmatpush1.msra.mxu0 0.0
    %1088 = vmatprep.subr.mxu0 0.0
    %1089 = vmatpush1.msra.mxu0 0.0
    %1090 = vmatprep.subr.mxu0 0.0
    %1091 = vmatpush1.msra.mxu0 0.0
    %1092 = vmatprep.subr.mxu0 0.0
    %1093 = vmatpush1.msra.mxu0 0.0
    %1094 = vmatprep.subr.mxu0 0.0
    %1095 = vmatpush1.msra.mxu0 0.0
    %1096 = vmatprep.subr.mxu0 0.0
    %1097 = vmatpush1.msra.mxu0 0.0
    %1098 = vmatprep.subr.mxu0 0.0
    %1099 = vmatpush1.msra.mxu0 0.0
    %1100 = vmatprep.subr.mxu0 0.0
    %1101 = vmatpush1.msra.mxu0 0.0
    %1102 = vmatprep.subr.mxu0 0.0
    %1103 = vmatpush1.msra.mxu0 0.0
    %1104 = vmatprep.subr.mxu0 0.0
    %1105 = vmatpush1.msra.mxu0 0.0
    %1106 = vmatprep.subr.mxu0 0.0
    %1107 = vmatpush1.msra.mxu0 0.0
    %1108 = vmatprep.subr.mxu0 0.0
    %1109 = vmatpush1.msra.mxu0 0.0
    %1110 = vmatprep.subr.mxu0 0.0
    %1111 = vmatpush1.msra.mxu0 0.0
    %1112 = vmatprep.subr.mxu0 0.0
    %1113 = vmatpush1.msra.mxu0 0.0
    %1114 = vmatprep.subr.mxu0 0.0
    %1115 = vmatpush1.msra.mxu0 0.0
    %1116 = vmatprep.subr.mxu0 0.0
    %1117 = vmatpush1.msra.mxu0 0.0
    %1118 = vmatprep.subr.mxu0 0.0
    %1119 = vmatpush1.msra.mxu0 0.0
    %1120 = vmatprep.subr.mxu0 0.0
    %1121 = vmatpush1.msra.mxu0 0.0
    %1122 = vmatprep.subr.mxu0 0.0
    %1123 = vmatpush1.msra.mxu0 0.0
    %1124 = vmatprep.subr.mxu0 0.0
    %1125 = vmatpush1.msra.mxu0 0.0
    %1126 = vmatprep.mubr.f32.mxu0 0.0
    %1127 = vmatmul.mubr.f32.gmra.mrb[0].mxu0 %v1060
    %v1128 = vpop.f32.mrb[0].mxu0
    %v1129 = vadd.f32 0.0, %v1128
    %v1130 = vpop.f32.mrb[0].mxu0
    %1131 = vdwg.mxu0
    %v1133 = vrot.slane %v1129, 2
    %v1135 = vadd.f32 %v1056, %v1133
    %v1136 = vsub.f32 0.0, %v1135
    %v1137 = vmul.f32 %v1136, 1.442695
    %v1138 = vpow.pop %v1137
    %v1139 = vadd.f32 %v1138, 1.0
    %v1140 = vrcp.pop %v1139
    %v1141 = vmul.f32 1.0, %v1140
    %v1142 = vtanh.pop %v1135
    %v1144 = vrot.slane %v1044, 6
    %v1146 = vmul.f32 %v1141, %v1144
    %1148 = vrot.lane.b32.xlu0 %v1142, 64
    %v1149 = vpop.permute.xlu0 %1148
    %v1151 = vmul.f32 %v1141, %v1149
    %1153 = vrot.lane.b32.xlu0 %v1151, 32
    %v1154 = vpop.permute.xlu0 %1153
    %v1156 = vadd.f32 %v1146, %v1154
    %v1157 = vtanh.pop %v1156
    %1159 = vrot.lane.b32.xlu0 %v1157, 64
    %v1160 = vpop.permute.xlu0 %1159
    %v1162 = vmul.f32 %v1141, %v1160
    %1164 = vrot.lane.b32.xlu0 %v1162, 32
    %v1165 = vpop.permute.xlu0 %1164
    %1167 = vst.msk [vmem:[#allocation2 + $0x8] sm:$0xc0] %vm724, %v1165
    %1168 = vst.msk [vmem:[#allocation11 - $0x6] sm:$0xc0] %vm724, %v1165
    %1170 = vrot.lane.b32.xlu0 %v1156, 96
    %v1171 = vpop.permute.xlu0 %1170
    %1173 = vst.msk [vmem:[#allocation12 - $0x6] sm:$0xc0] %vm724, %v1171
    %v1174 = vld [vmem:[#allocation2] sm:$0xff]
    %v1175 = vld [vmem:[#allocation2 + $0x8] sm:$0xff]
    %v1176 = vld [vmem:[%s8] sm:$0xff]
    %v1177 = vld [vmem:[%s8 + $0x8] sm:$0xff]
    %v1178 = vld [vmem:[%s8 + $0x10] sm:$0xff]
    %v1179 = vld [vmem:[%s8 + $0x18] sm:$0xff]
    %v1180 = vld [vmem:[#allocation6] sm:$0x1]
    %v1182 = vlaneseq
    %v1183 = vshrl.u32 %v1182, 7
    %v1184 = vsub.s32 0, %v1183
    %v1185 = vrot.slane %v1180, %v1184
    %v1188 = vsel %vm274, %v1174, 0
    %v1191 = vsel %vm274, %v1175, 0
    %1193 = vmatprep.subr.mxu0 0.0
    %1194 = vmatpush1.msra.mxu0 %v1176
    %1195 = vmatprep.subr.mxu0 0.0
    %1196 = vmatpush1.msra.mxu0 %v1177
    %1197 = vmatprep.subr.mxu0 0.0
    %1198 = vmatpush1.msra.mxu0 %v1178
    %1199 = vmatprep.subr.mxu0 0.0
    %1200 = vmatpush1.msra.mxu0 %v1179
    %1201 = vmatprep.subr.mxu0 0.0
    %1202 = vmatpush1.msra.mxu0 0.0
    %1203 = vmatprep.subr.mxu0 0.0
    %1204 = vmatpush1.msra.mxu0 0.0
    %1205 = vmatprep.subr.mxu0 0.0
    %1206 = vmatpush1.msra.mxu0 0.0
    %1207 = vmatprep.subr.mxu0 0.0
    %1208 = vmatpush1.msra.mxu0 0.0
    %1209 = vmatprep.subr.mxu0 0.0
    %1210 = vmatpush1.msra.mxu0 0.0
    %1211 = vmatprep.subr.mxu0 0.0
    %1212 = vmatpush1.msra.mxu0 0.0
    %1213 = vmatprep.subr.mxu0 0.0
    %1214 = vmatpush1.msra.mxu0 0.0
    %1215 = vmatprep.subr.mxu0 0.0
    %1216 = vmatpush1.msra.mxu0 0.0
    %1217 = vmatprep.subr.mxu0 0.0
    %1218 = vmatpush1.msra.mxu0 0.0
    %1219 = vmatprep.subr.mxu0 0.0
    %1220 = vmatpush1.msra.mxu0 0.0
    %1221 = vmatprep.subr.mxu0 0.0
    %1222 = vmatpush1.msra.mxu0 0.0
    %1223 = vmatprep.subr.mxu0 0.0
    %1224 = vmatpush1.msra.mxu0 0.0
    %1225 = vmatprep.subr.mxu0 0.0
    %1226 = vmatpush1.msra.mxu0 0.0
    %1227 = vmatprep.subr.mxu0 0.0
    %1228 = vmatpush1.msra.mxu0 0.0
    %1229 = vmatprep.subr.mxu0 0.0
    %1230 = vmatpush1.msra.mxu0 0.0
    %1231 = vmatprep.subr.mxu0 0.0
    %1232 = vmatpush1.msra.mxu0 0.0
    %1233 = vmatprep.subr.mxu0 0.0
    %1234 = vmatpush1.msra.mxu0 0.0
    %1235 = vmatprep.subr.mxu0 0.0
    %1236 = vmatpush1.msra.mxu0 0.0
    %1237 = vmatprep.subr.mxu0 0.0
    %1238 = vmatpush1.msra.mxu0 0.0
    %1239 = vmatprep.subr.mxu0 0.0
    %1240 = vmatpush1.msra.mxu0 0.0
    %1241 = vmatprep.subr.mxu0 0.0
    %1242 = vmatpush1.msra.mxu0 0.0
    %1243 = vmatprep.subr.mxu0 0.0
    %1244 = vmatpush1.msra.mxu0 0.0
    %1245 = vmatprep.subr.mxu0 0.0
    %1246 = vmatpush1.msra.mxu0 0.0
    %1247 = vmatprep.subr.mxu0 0.0
    %1248 = vmatpush1.msra.mxu0 0.0
    %1249 = vmatprep.subr.mxu0 0.0
    %1250 = vmatpush1.msra.mxu0 0.0
    %1251 = vmatprep.subr.mxu0 0.0
    %1252 = vmatpush1.msra.mxu0 0.0
    %1253 = vmatprep.subr.mxu0 0.0
    %1254 = vmatpush1.msra.mxu0 0.0
    %1255 = vmatprep.subr.mxu0 0.0
    %1256 = vmatpush1.msra.mxu0 0.0
    %1257 = vmatprep.mubr.f32.mxu0 0.0
    %1258 = vmatmul.mubr.f32.gmra.mrb[0].mxu0 %v1188
    %v1259 = vpop.f32.mrb[0].mxu0
    %v1260 = vadd.f32 %v1185, %v1259
    %v1261 = vpop.f32.mrb[0].mxu0
    %1262 = vmatprep.mubr.f32.mxu0 0.0
    %1263 = vmatmul.mubr.f32.gmra.mrb[0].mxu0 %v1191
    %v1264 = vpop.f32.mrb[0].mxu0
    %v1265 = vadd.f32 %v1185, %v1264
    %v1266 = vpop.f32.mrb[0].mxu0
    %1267 = vdwg.mxu0
    %v1268 = vld [vmem:[%s9] sm:$0xff]
    %v1269 = vld [vmem:[%s9 + $0x8] sm:$0xff]
    %v1270 = vld [vmem:[%s9 + $0x10] sm:$0xff]
    %v1271 = vld [vmem:[%s9 + $0x18] sm:$0xff]
    %s1272 = scalar_lea.vmem %s2, 2
    %v1273 = vld [vmem:[%s1272] sm:$0x3]
    %s1274 = scalar_lea.vmem %s3, 2
    %v1275 = vld [vmem:[%s1274] sm:$0x3]
    %v1277 = vsel %vm274, %v1273, 0
    %1279 = vmatprep.subr.mxu0 0.0
    %1280 = vmatpush1.msra.mxu0 %v1268
    %1281 = vmatprep.subr.mxu0 0.0
    %1282 = vmatpush1.msra.mxu0 %v1269
    %1283 = vmatprep.subr.mxu0 0.0
    %1284 = vmatpush1.msra.mxu0 %v1270
    %1285 = vmatprep.subr.mxu0 0.0
    %1286 = vmatpush1.msra.mxu0 %v1271
    %1287 = vmatprep.subr.mxu0 0.0
    %1288 = vmatpush1.msra.mxu0 0.0
    %1289 = vmatprep.subr.mxu0 0.0
    %1290 = vmatpush1.msra.mxu0 0.0
    %1291 = vmatprep.subr.mxu0 0.0
    %1292 = vmatpush1.msra.mxu0 0.0
    %1293 = vmatprep.subr.mxu0 0.0
    %1294 = vmatpush1.msra.mxu0 0.0
    %1295 = vmatprep.subr.mxu0 0.0
    %1296 = vmatpush1.msra.mxu0 0.0
    %1297 = vmatprep.subr.mxu0 0.0
    %1298 = vmatpush1.msra.mxu0 0.0
    %1299 = vmatprep.subr.mxu0 0.0
    %1300 = vmatpush1.msra.mxu0 0.0
    %1301 = vmatprep.subr.mxu0 0.0
    %1302 = vmatpush1.msra.mxu0 0.0
    %1303 = vmatprep.subr.mxu0 0.0
    %1304 = vmatpush1.msra.mxu0 0.0
    %1305 = vmatprep.subr.mxu0 0.0
    %1306 = vmatpush1.msra.mxu0 0.0
    %1307 = vmatprep.subr.mxu0 0.0
    %1308 = vmatpush1.msra.mxu0 0.0
    %1309 = vmatprep.subr.mxu0 0.0
    %1310 = vmatpush1.msra.mxu0 0.0
    %1311 = vmatprep.subr.mxu0 0.0
    %1312 = vmatpush1.msra.mxu0 0.0
    %1313 = vmatprep.subr.mxu0 0.0
    %1314 = vmatpush1.msra.mxu0 0.0
    %1315 = vmatprep.subr.mxu0 0.0
    %1316 = vmatpush1.msra.mxu0 0.0
    %1317 = vmatprep.subr.mxu0 0.0
    %1318 = vmatpush1.msra.mxu0 0.0
    %1319 = vmatprep.subr.mxu0 0.0
    %1320 = vmatpush1.msra.mxu0 0.0
    %1321 = vmatprep.subr.mxu0 0.0
    %1322 = vmatpush1.msra.mxu0 0.0
    %1323 = vmatprep.subr.mxu0 0.0
    %1324 = vmatpush1.msra.mxu0 0.0
    %1325 = vmatprep.subr.mxu0 0.0
    %1326 = vmatpush1.msra.mxu0 0.0
    %1327 = vmatprep.subr.mxu0 0.0
    %1328 = vmatpush1.msra.mxu0 0.0
    %1329 = vmatprep.subr.mxu0 0.0
    %1330 = vmatpush1.msra.mxu0 0.0
    %1331 = vmatprep.subr.mxu0 0.0
    %1332 = vmatpush1.msra.mxu0 0.0
    %1333 = vmatprep.subr.mxu0 0.0
    %1334 = vmatpush1.msra.mxu0 0.0
    %1335 = vmatprep.subr.mxu0 0.0
    %1336 = vmatpush1.msra.mxu0 0.0
    %1337 = vmatprep.subr.mxu0 0.0
    %1338 = vmatpush1.msra.mxu0 0.0
    %1339 = vmatprep.subr.mxu0 0.0
    %1340 = vmatpush1.msra.mxu0 0.0
    %1341 = vmatprep.subr.mxu0 0.0
    %1342 = vmatpush1.msra.mxu0 0.0
    %1343 = vmatprep.mubr.f32.mxu0 0.0
    %1344 = vmatmul.mubr.f32.gmra.mrb[0].mxu0 %v1277
    %v1345 = vpop.f32.mrb[0].mxu0
    %v1346 = vadd.f32 0.0, %v1345
    %v1347 = vpop.f32.mrb[0].mxu0
    %1348 = vdwg.mxu0
    %v1349 = vadd.f32 %v1260, %v1346
    %v1350 = vsub.f32 0.0, %v1349
    %v1351 = vmul.f32 %v1350, 1.442695
    %v1352 = vpow.pop %v1351
    %v1353 = vadd.f32 %v1352, 1.0
    %v1354 = vrcp.pop %v1353
    %v1355 = vmul.f32 1.0, %v1354
    %v1356 = vtanh.pop %v1349
    %1358 = vrot.lane.b32.xlu0 %v1275, 32
    %v1359 = vpop.permute.xlu0 %1358
    %v1361 = vmul.f32 %v1355, %v1359
    %1363 = vrot.lane.b32.xlu0 %v1356, 64
    %v1364 = vpop.permute.xlu0 %1363
    %v1366 = vmul.f32 %v1355, %v1364
    %1368 = vrot.lane.b32.xlu0 %v1366, 32
    %v1369 = vpop.permute.xlu0 %1368
    %v1371 = vadd.f32 %v1361, %v1369
    %v1372 = vtanh.pop %v1371
    %1374 = vrot.lane.b32.xlu0 %v1372, 64
    %v1375 = vpop.permute.xlu0 %1374
    %v1377 = vmul.f32 %v1355, %v1375
    %1379 = vrot.lane.b32.xlu0 %v1377, 32
    %v1380 = vpop.permute.xlu0 %1379
    %1382 = vst.msk [vmem:[#allocation2] sm:$0x3] %vm381, %v1380
    %v1383 = vsel %vm274, %v1380, 0
    %1385 = vmatprep.subr.mxu0 0.0
    %1386 = vmatpush1.msra.mxu0 %v1268
    %1387 = vmatprep.subr.mxu0 0.0
    %1388 = vmatpush1.msra.mxu0 %v1269
    %1389 = vmatprep.subr.mxu0 0.0
    %1390 = vmatpush1.msra.mxu0 %v1270
    %1391 = vmatprep.subr.mxu0 0.0
    %1392 = vmatpush1.msra.mxu0 %v1271
    %1393 = vmatprep.subr.mxu0 0.0
    %1394 = vmatpush1.msra.mxu0 0.0
    %1395 = vmatprep.subr.mxu0 0.0
    %1396 = vmatpush1.msra.mxu0 0.0
    %1397 = vmatprep.subr.mxu0 0.0
    %1398 = vmatpush1.msra.mxu0 0.0
    %1399 = vmatprep.subr.mxu0 0.0
    %1400 = vmatpush1.msra.mxu0 0.0
    %1401 = vmatprep.subr.mxu0 0.0
    %1402 = vmatpush1.msra.mxu0 0.0
    %1403 = vmatprep.subr.mxu0 0.0
    %1404 = vmatpush1.msra.mxu0 0.0
    %1405 = vmatprep.subr.mxu0 0.0
    %1406 = vmatpush1.msra.mxu0 0.0
    %1407 = vmatprep.subr.mxu0 0.0
    %1408 = vmatpush1.msra.mxu0 0.0
    %1409 = vmatprep.subr.mxu0 0.0
    %1410 = vmatpush1.msra.mxu0 0.0
    %1411 = vmatprep.subr.mxu0 0.0
    %1412 = vmatpush1.msra.mxu0 0.0
    %1413 = vmatprep.subr.mxu0 0.0
    %1414 = vmatpush1.msra.mxu0 0.0
    %1415 = vmatprep.subr.mxu0 0.0
    %1416 = vmatpush1.msra.mxu0 0.0
    %1417 = vmatprep.subr.mxu0 0.0
    %1418 = vmatpush1.msra.mxu0 0.0
    %1419 = vmatprep.subr.mxu0 0.0
    %1420 = vmatpush1.msra.mxu0 0.0
    %1421 = vmatprep.subr.mxu0 0.0
    %1422 = vmatpush1.msra.mxu0 0.0
    %1423 = vmatprep.subr.mxu0 0.0
    %1424 = vmatpush1.msra.mxu0 0.0
    %1425 = vmatprep.subr.mxu0 0.0
    %1426 = vmatpush1.msra.mxu0 0.0
    %1427 = vmatprep.subr.mxu0 0.0
    %1428 = vmatpush1.msra.mxu0 0.0
    %1429 = vmatprep.subr.mxu0 0.0
    %1430 = vmatpush1.msra.mxu0 0.0
    %1431 = vmatprep.subr.mxu0 0.0
    %1432 = vmatpush1.msra.mxu0 0.0
    %1433 = vmatprep.subr.mxu0 0.0
    %1434 = vmatpush1.msra.mxu0 0.0
    %1435 = vmatprep.subr.mxu0 0.0
    %1436 = vmatpush1.msra.mxu0 0.0
    %1437 = vmatprep.subr.mxu0 0.0
    %1438 = vmatpush1.msra.mxu0 0.0
    %1439 = vmatprep.subr.mxu0 0.0
    %1440 = vmatpush1.msra.mxu0 0.0
    %1441 = vmatprep.subr.mxu0 0.0
    %1442 = vmatpush1.msra.mxu0 0.0
    %1443 = vmatprep.subr.mxu0 0.0
    %1444 = vmatpush1.msra.mxu0 0.0
    %1445 = vmatprep.subr.mxu0 0.0
    %1446 = vmatpush1.msra.mxu0 0.0
    %1447 = vmatprep.subr.mxu0 0.0
    %1448 = vmatpush1.msra.mxu0 0.0
    %1449 = vmatprep.mubr.f32.mxu0 0.0
    %1450 = vmatmul.mubr.f32.gmra.mrb[0].mxu0 %v1383
    %v1451 = vpop.f32.mrb[0].mxu0
    %v1452 = vadd.f32 0.0, %v1451
    %v1453 = vpop.f32.mrb[0].mxu0
    %1454 = vdwg.mxu0
    %v1456 = vrot.slane %v1452, 6
    %v1458 = vadd.f32 %v1260, %v1456
    %v1459 = vsub.f32 0.0, %v1458
    %v1460 = vmul.f32 %v1459, 1.442695
    %v1461 = vpow.pop %v1460
    %v1462 = vadd.f32 %v1461, 1.0
    %v1463 = vrcp.pop %v1462
    %v1464 = vmul.f32 1.0, %v1463
    %v1465 = vtanh.pop %v1458
    %v1467 = vrot.slane %v1371, 6
    %v1469 = vmul.f32 %v1464, %v1467
    %1471 = vrot.lane.b32.xlu0 %v1465, 64
    %v1472 = vpop.permute.xlu0 %1471
    %v1474 = vmul.f32 %v1464, %v1472
    %1476 = vrot.lane.b32.xlu0 %v1474, 32
    %v1477 = vpop.permute.xlu0 %1476
    %v1479 = vadd.f32 %v1469, %v1477
    %v1480 = vtanh.pop %v1479
    %1482 = vrot.lane.b32.xlu0 %v1480, 64
    %v1483 = vpop.permute.xlu0 %1482
    %v1485 = vmul.f32 %v1464, %v1483
    %1487 = vrot.lane.b32.xlu0 %v1485, 32
    %v1488 = vpop.permute.xlu0 %1487
    %1490 = vst.msk [vmem:[#allocation2] sm:$0xc] %vm494, %v1488
    %v1491 = vrot.slane %v1485, 2
    %1492 = vrot.lane.b32.xlu0 %v1491, 32
    %v1493 = vpop.permute.xlu0 %1492
    %v1494 = vsel %vm274, %v1493, 0
    %1496 = vmatprep.subr.mxu0 0.0
    %1497 = vmatpush1.msra.mxu0 %v1268
    %1498 = vmatprep.subr.mxu0 0.0
    %1499 = vmatpush1.msra.mxu0 %v1269
    %1500 = vmatprep.subr.mxu0 0.0
    %1501 = vmatpush1.msra.mxu0 %v1270
    %1502 = vmatprep.subr.mxu0 0.0
    %1503 = vmatpush1.msra.mxu0 %v1271
    %1504 = vmatprep.subr.mxu0 0.0
    %1505 = vmatpush1.msra.mxu0 0.0
    %1506 = vmatprep.subr.mxu0 0.0
    %1507 = vmatpush1.msra.mxu0 0.0
    %1508 = vmatprep.subr.mxu0 0.0
    %1509 = vmatpush1.msra.mxu0 0.0
    %1510 = vmatprep.subr.mxu0 0.0
    %1511 = vmatpush1.msra.mxu0 0.0
    %1512 = vmatprep.subr.mxu0 0.0
    %1513 = vmatpush1.msra.mxu0 0.0
    %1514 = vmatprep.subr.mxu0 0.0
    %1515 = vmatpush1.msra.mxu0 0.0
    %1516 = vmatprep.subr.mxu0 0.0
    %1517 = vmatpush1.msra.mxu0 0.0
    %1518 = vmatprep.subr.mxu0 0.0
    %1519 = vmatpush1.msra.mxu0 0.0
    %1520 = vmatprep.subr.mxu0 0.0
    %1521 = vmatpush1.msra.mxu0 0.0
    %1522 = vmatprep.subr.mxu0 0.0
    %1523 = vmatpush1.msra.mxu0 0.0
    %1524 = vmatprep.subr.mxu0 0.0
    %1525 = vmatpush1.msra.mxu0 0.0
    %1526 = vmatprep.subr.mxu0 0.0
    %1527 = vmatpush1.msra.mxu0 0.0
    %1528 = vmatprep.subr.mxu0 0.0
    %1529 = vmatpush1.msra.mxu0 0.0
    %1530 = vmatprep.subr.mxu0 0.0
    %1531 = vmatpush1.msra.mxu0 0.0
    %1532 = vmatprep.subr.mxu0 0.0
    %1533 = vmatpush1.msra.mxu0 0.0
    %1534 = vmatprep.subr.mxu0 0.0
    %1535 = vmatpush1.msra.mxu0 0.0
    %1536 = vmatprep.subr.mxu0 0.0
    %1537 = vmatpush1.msra.mxu0 0.0
    %1538 = vmatprep.subr.mxu0 0.0
    %1539 = vmatpush1.msra.mxu0 0.0
    %1540 = vmatprep.subr.mxu0 0.0
    %1541 = vmatpush1.msra.mxu0 0.0
    %1542 = vmatprep.subr.mxu0 0.0
    %1543 = vmatpush1.msra.mxu0 0.0
    %1544 = vmatprep.subr.mxu0 0.0
    %1545 = vmatpush1.msra.mxu0 0.0
    %1546 = vmatprep.subr.mxu0 0.0
    %1547 = vmatpush1.msra.mxu0 0.0
    %1548 = vmatprep.subr.mxu0 0.0
    %1549 = vmatpush1.msra.mxu0 0.0
    %1550 = vmatprep.subr.mxu0 0.0
    %1551 = vmatpush1.msra.mxu0 0.0
    %1552 = vmatprep.subr.mxu0 0.0
    %1553 = vmatpush1.msra.mxu0 0.0
    %1554 = vmatprep.subr.mxu0 0.0
    %1555 = vmatpush1.msra.mxu0 0.0
    %1556 = vmatprep.subr.mxu0 0.0
    %1557 = vmatpush1.msra.mxu0 0.0
    %1558 = vmatprep.subr.mxu0 0.0
    %1559 = vmatpush1.msra.mxu0 0.0
    %1560 = vmatprep.mubr.f32.mxu0 0.0
    %1561 = vmatmul.mubr.f32.gmra.mrb[0].mxu0 %v1494
    %v1562 = vpop.f32.mrb[0].mxu0
    %v1563 = vadd.f32 0.0, %v1562
    %v1564 = vpop.f32.mrb[0].mxu0
    %1565 = vdwg.mxu0
    %v1567 = vrot.slane %v1563, 4
    %v1569 = vadd.f32 %v1260, %v1567
    %v1570 = vsub.f32 0.0, %v1569
    %v1571 = vmul.f32 %v1570, 1.442695
    %v1572 = vpow.pop %v1571
    %v1573 = vadd.f32 %v1572, 1.0
    %v1574 = vrcp.pop %v1573
    %v1575 = vmul.f32 1.0, %v1574
    %v1576 = vtanh.pop %v1569
    %v1578 = vrot.slane %v1479, 6
    %v1580 = vmul.f32 %v1575, %v1578
    %1582 = vrot.lane.b32.xlu0 %v1576, 64
    %v1583 = vpop.permute.xlu0 %1582
    %v1585 = vmul.f32 %v1575, %v1583
    %1587 = vrot.lane.b32.xlu0 %v1585, 32
    %v1588 = vpop.permute.xlu0 %1587
    %v1590 = vadd.f32 %v1580, %v1588
    %v1591 = vtanh.pop %v1590
    %1593 = vrot.lane.b32.xlu0 %v1591, 64
    %v1594 = vpop.permute.xlu0 %1593
    %v1596 = vmul.f32 %v1575, %v1594
    %1598 = vrot.lane.b32.xlu0 %v1596, 32
    %v1599 = vpop.permute.xlu0 %1598
    %1601 = vst.msk [vmem:[#allocation2] sm:$0x30] %vm609, %v1599
    %v1602 = vrot.slane %v1596, 4
    %1603 = vrot.lane.b32.xlu0 %v1602, 32
    %v1604 = vpop.permute.xlu0 %1603
    %v1605 = vsel %vm274, %v1604, 0
    %1607 = vmatprep.subr.mxu0 0.0
    %1608 = vmatpush1.msra.mxu0 %v1268
    %1609 = vmatprep.subr.mxu0 0.0
    %1610 = vmatpush1.msra.mxu0 %v1269
    %1611 = vmatprep.subr.mxu0 0.0
    %1612 = vmatpush1.msra.mxu0 %v1270
    %1613 = vmatprep.subr.mxu0 0.0
    %1614 = vmatpush1.msra.mxu0 %v1271
    %1615 = vmatprep.subr.mxu0 0.0
    %1616 = vmatpush1.msra.mxu0 0.0
    %1617 = vmatprep.subr.mxu0 0.0
    %1618 = vmatpush1.msra.mxu0 0.0
    %1619 = vmatprep.subr.mxu0 0.0
    %1620 = vmatpush1.msra.mxu0 0.0
    %1621 = vmatprep.subr.mxu0 0.0
    %1622 = vmatpush1.msra.mxu0 0.0
    %1623 = vmatprep.subr.mxu0 0.0
    %1624 = vmatpush1.msra.mxu0 0.0
    %1625 = vmatprep.subr.mxu0 0.0
    %1626 = vmatpush1.msra.mxu0 0.0
    %1627 = vmatprep.subr.mxu0 0.0
    %1628 = vmatpush1.msra.mxu0 0.0
    %1629 = vmatprep.subr.mxu0 0.0
    %1630 = vmatpush1.msra.mxu0 0.0
    %1631 = vmatprep.subr.mxu0 0.0
    %1632 = vmatpush1.msra.mxu0 0.0
    %1633 = vmatprep.subr.mxu0 0.0
    %1634 = vmatpush1.msra.mxu0 0.0
    %1635 = vmatprep.subr.mxu0 0.0
    %1636 = vmatpush1.msra.mxu0 0.0
    %1637 = vmatprep.subr.mxu0 0.0
    %1638 = vmatpush1.msra.mxu0 0.0
    %1639 = vmatprep.subr.mxu0 0.0
    %1640 = vmatpush1.msra.mxu0 0.0
    %1641 = vmatprep.subr.mxu0 0.0
    %1642 = vmatpush1.msra.mxu0 0.0
    %1643 = vmatprep.subr.mxu0 0.0
    %1644 = vmatpush1.msra.mxu0 0.0
    %1645 = vmatprep.subr.mxu0 0.0
    %1646 = vmatpush1.msra.mxu0 0.0
    %1647 = vmatprep.subr.mxu0 0.0
    %1648 = vmatpush1.msra.mxu0 0.0
    %1649 = vmatprep.subr.mxu0 0.0
    %1650 = vmatpush1.msra.mxu0 0.0
    %1651 = vmatprep.subr.mxu0 0.0
    %1652 = vmatpush1.msra.mxu0 0.0
    %1653 = vmatprep.subr.mxu0 0.0
    %1654 = vmatpush1.msra.mxu0 0.0
    %1655 = vmatprep.subr.mxu0 0.0
    %1656 = vmatpush1.msra.mxu0 0.0
    %1657 = vmatprep.subr.mxu0 0.0
    %1658 = vmatpush1.msra.mxu0 0.0
    %1659 = vmatprep.subr.mxu0 0.0
    %1660 = vmatpush1.msra.mxu0 0.0
    %1661 = vmatprep.subr.mxu0 0.0
    %1662 = vmatpush1.msra.mxu0 0.0
    %1663 = vmatprep.subr.mxu0 0.0
    %1664 = vmatpush1.msra.mxu0 0.0
    %1665 = vmatprep.subr.mxu0 0.0
    %1666 = vmatpush1.msra.mxu0 0.0
    %1667 = vmatprep.subr.mxu0 0.0
    %1668 = vmatpush1.msra.mxu0 0.0
    %1669 = vmatprep.subr.mxu0 0.0
    %1670 = vmatpush1.msra.mxu0 0.0
    %1671 = vmatprep.mubr.f32.mxu0 0.0
    %1672 = vmatmul.mubr.f32.gmra.mrb[0].mxu0 %v1605
    %v1673 = vpop.f32.mrb[0].mxu0
    %v1674 = vadd.f32 0.0, %v1673
    %v1675 = vpop.f32.mrb[0].mxu0
    %1676 = vdwg.mxu0
    %v1678 = vrot.slane %v1674, 2
    %v1680 = vadd.f32 %v1260, %v1678
    %v1681 = vsub.f32 0.0, %v1680
    %v1682 = vmul.f32 %v1681, 1.442695
    %v1683 = vpow.pop %v1682
    %v1684 = vadd.f32 %v1683, 1.0
    %v1685 = vrcp.pop %v1684
    %v1686 = vmul.f32 1.0, %v1685
    %v1687 = vtanh.pop %v1680
    %v1689 = vrot.slane %v1590, 6
    %v1691 = vmul.f32 %v1686, %v1689
    %1693 = vrot.lane.b32.xlu0 %v1687, 64
    %v1694 = vpop.permute.xlu0 %1693
    %v1696 = vmul.f32 %v1686, %v1694
    %1698 = vrot.lane.b32.xlu0 %v1696, 32
    %v1699 = vpop.permute.xlu0 %1698
    %v1701 = vadd.f32 %v1691, %v1699
    %v1702 = vtanh.pop %v1701
    %1704 = vrot.lane.b32.xlu0 %v1702, 64
    %v1705 = vpop.permute.xlu0 %1704
    %v1707 = vmul.f32 %v1686, %v1705
    %1709 = vrot.lane.b32.xlu0 %v1707, 32
    %v1710 = vpop.permute.xlu0 %1709
    %1712 = vst.msk [vmem:[#allocation2] sm:$0xc0] %vm724, %v1710
    %v1713 = vrot.slane %v1707, 6
    %1714 = vrot.lane.b32.xlu0 %v1713, 32
    %v1715 = vpop.permute.xlu0 %1714
    %v1716 = vsel %vm274, %v1715, 0
    %1718 = vmatprep.subr.mxu0 0.0
    %1719 = vmatpush1.msra.mxu0 %v1268
    %1720 = vmatprep.subr.mxu0 0.0
    %1721 = vmatpush1.msra.mxu0 %v1269
    %1722 = vmatprep.subr.mxu0 0.0
    %1723 = vmatpush1.msra.mxu0 %v1270
    %1724 = vmatprep.subr.mxu0 0.0
    %1725 = vmatpush1.msra.mxu0 %v1271
    %1726 = vmatprep.subr.mxu0 0.0
    %1727 = vmatpush1.msra.mxu0 0.0
    %1728 = vmatprep.subr.mxu0 0.0
    %1729 = vmatpush1.msra.mxu0 0.0
    %1730 = vmatprep.subr.mxu0 0.0
    %1731 = vmatpush1.msra.mxu0 0.0
    %1732 = vmatprep.subr.mxu0 0.0
    %1733 = vmatpush1.msra.mxu0 0.0
    %1734 = vmatprep.subr.mxu0 0.0
    %1735 = vmatpush1.msra.mxu0 0.0
    %1736 = vmatprep.subr.mxu0 0.0
    %1737 = vmatpush1.msra.mxu0 0.0
    %1738 = vmatprep.subr.mxu0 0.0
    %1739 = vmatpush1.msra.mxu0 0.0
    %1740 = vmatprep.subr.mxu0 0.0
    %1741 = vmatpush1.msra.mxu0 0.0
    %1742 = vmatprep.subr.mxu0 0.0
    %1743 = vmatpush1.msra.mxu0 0.0
    %1744 = vmatprep.subr.mxu0 0.0
    %1745 = vmatpush1.msra.mxu0 0.0
    %1746 = vmatprep.subr.mxu0 0.0
    %1747 = vmatpush1.msra.mxu0 0.0
    %1748 = vmatprep.subr.mxu0 0.0
    %1749 = vmatpush1.msra.mxu0 0.0
    %1750 = vmatprep.subr.mxu0 0.0
    %1751 = vmatpush1.msra.mxu0 0.0
    %1752 = vmatprep.subr.mxu0 0.0
    %1753 = vmatpush1.msra.mxu0 0.0
    %1754 = vmatprep.subr.mxu0 0.0
    %1755 = vmatpush1.msra.mxu0 0.0
    %1756 = vmatprep.subr.mxu0 0.0
    %1757 = vmatpush1.msra.mxu0 0.0
    %1758 = vmatprep.subr.mxu0 0.0
    %1759 = vmatpush1.msra.mxu0 0.0
    %1760 = vmatprep.subr.mxu0 0.0
    %1761 = vmatpush1.msra.mxu0 0.0
    %1762 = vmatprep.subr.mxu0 0.0
    %1763 = vmatpush1.msra.mxu0 0.0
    %1764 = vmatprep.subr.mxu0 0.0
    %1765 = vmatpush1.msra.mxu0 0.0
    %1766 = vmatprep.subr.mxu0 0.0
    %1767 = vmatpush1.msra.mxu0 0.0
    %1768 = vmatprep.subr.mxu0 0.0
    %1769 = vmatpush1.msra.mxu0 0.0
    %1770 = vmatprep.subr.mxu0 0.0
    %1771 = vmatpush1.msra.mxu0 0.0
    %1772 = vmatprep.subr.mxu0 0.0
    %1773 = vmatpush1.msra.mxu0 0.0
    %1774 = vmatprep.subr.mxu0 0.0
    %1775 = vmatpush1.msra.mxu0 0.0
    %1776 = vmatprep.subr.mxu0 0.0
    %1777 = vmatpush1.msra.mxu0 0.0
    %1778 = vmatprep.subr.mxu0 0.0
    %1779 = vmatpush1.msra.mxu0 0.0
    %1780 = vmatprep.subr.mxu0 0.0
    %1781 = vmatpush1.msra.mxu0 0.0
    %1782 = vmatprep.mubr.f32.mxu0 0.0
    %1783 = vmatmul.mubr.f32.gmra.mrb[0].mxu0 %v1716
    %v1784 = vpop.f32.mrb[0].mxu0
    %v1785 = vadd.f32 0.0, %v1784
    %v1786 = vpop.f32.mrb[0].mxu0
    %1787 = vdwg.mxu0
    %v1788 = vadd.f32 %v1265, %v1785
    %v1789 = vsub.f32 0.0, %v1788
    %v1790 = vmul.f32 %v1789, 1.442695
    %v1791 = vpow.pop %v1790
    %v1792 = vadd.f32 %v1791, 1.0
    %v1793 = vrcp.pop %v1792
    %v1794 = vmul.f32 1.0, %v1793
    %v1795 = vtanh.pop %v1788
    %v1797 = vrot.slane %v1701, 6
    %v1799 = vmul.f32 %v1794, %v1797
    %1801 = vrot.lane.b32.xlu0 %v1795, 64
    %v1802 = vpop.permute.xlu0 %1801
    %v1804 = vmul.f32 %v1794, %v1802
    %1806 = vrot.lane.b32.xlu0 %v1804, 32
    %v1807 = vpop.permute.xlu0 %1806
    %v1809 = vadd.f32 %v1799, %v1807
    %v1810 = vtanh.pop %v1809
    %1812 = vrot.lane.b32.xlu0 %v1810, 64
    %v1813 = vpop.permute.xlu0 %1812
    %v1815 = vmul.f32 %v1794, %v1813
    %1817 = vrot.lane.b32.xlu0 %v1815, 32
    %v1818 = vpop.permute.xlu0 %1817
    %1820 = vst.msk [vmem:[#allocation2 + $0x8] sm:$0x3] %vm381, %v1818
    %v1821 = vsel %vm274, %v1818, 0
    %1823 = vmatprep.subr.mxu0 0.0
    %1824 = vmatpush1.msra.mxu0 %v1268
    %1825 = vmatprep.subr.mxu0 0.0
    %1826 = vmatpush1.msra.mxu0 %v1269
    %1827 = vmatprep.subr.mxu0 0.0
    %1828 = vmatpush1.msra.mxu0 %v1270
    %1829 = vmatprep.subr.mxu0 0.0
    %1830 = vmatpush1.msra.mxu0 %v1271
    %1831 = vmatprep.subr.mxu0 0.0
    %1832 = vmatpush1.msra.mxu0 0.0
    %1833 = vmatprep.subr.mxu0 0.0
    %1834 = vmatpush1.msra.mxu0 0.0
    %1835 = vmatprep.subr.mxu0 0.0
    %1836 = vmatpush1.msra.mxu0 0.0
    %1837 = vmatprep.subr.mxu0 0.0
    %1838 = vmatpush1.msra.mxu0 0.0
    %1839 = vmatprep.subr.mxu0 0.0
    %1840 = vmatpush1.msra.mxu0 0.0
    %1841 = vmatprep.subr.mxu0 0.0
    %1842 = vmatpush1.msra.mxu0 0.0
    %1843 = vmatprep.subr.mxu0 0.0
    %1844 = vmatpush1.msra.mxu0 0.0
    %1845 = vmatprep.subr.mxu0 0.0
    %1846 = vmatpush1.msra.mxu0 0.0
    %1847 = vmatprep.subr.mxu0 0.0
    %1848 = vmatpush1.msra.mxu0 0.0
    %1849 = vmatprep.subr.mxu0 0.0
    %1850 = vmatpush1.msra.mxu0 0.0
    %1851 = vmatprep.subr.mxu0 0.0
    %1852 = vmatpush1.msra.mxu0 0.0
    %1853 = vmatprep.subr.mxu0 0.0
    %1854 = vmatpush1.msra.mxu0 0.0
    %1855 = vmatprep.subr.mxu0 0.0
    %1856 = vmatpush1.msra.mxu0 0.0
    %1857 = vmatprep.subr.mxu0 0.0
    %1858 = vmatpush1.msra.mxu0 0.0
    %1859 = vmatprep.subr.mxu0 0.0
    %1860 = vmatpush1.msra.mxu0 0.0
    %1861 = vmatprep.subr.mxu0 0.0
    %1862 = vmatpush1.msra.mxu0 0.0
    %1863 = vmatprep.subr.mxu0 0.0
    %1864 = vmatpush1.msra.mxu0 0.0
    %1865 = vmatprep.subr.mxu0 0.0
    %1866 = vmatpush1.msra.mxu0 0.0
    %1867 = vmatprep.subr.mxu0 0.0
    %1868 = vmatpush1.msra.mxu0 0.0
    %1869 = vmatprep.subr.mxu0 0.0
    %1870 = vmatpush1.msra.mxu0 0.0
    %1871 = vmatprep.subr.mxu0 0.0
    %1872 = vmatpush1.msra.mxu0 0.0
    %1873 = vmatprep.subr.mxu0 0.0
    %1874 = vmatpush1.msra.mxu0 0.0
    %1875 = vmatprep.subr.mxu0 0.0
    %1876 = vmatpush1.msra.mxu0 0.0
    %1877 = vmatprep.subr.mxu0 0.0
    %1878 = vmatpush1.msra.mxu0 0.0
    %1879 = vmatprep.subr.mxu0 0.0
    %1880 = vmatpush1.msra.mxu0 0.0
    %1881 = vmatprep.subr.mxu0 0.0
    %1882 = vmatpush1.msra.mxu0 0.0
    %1883 = vmatprep.subr.mxu0 0.0
    %1884 = vmatpush1.msra.mxu0 0.0
    %1885 = vmatprep.subr.mxu0 0.0
    %1886 = vmatpush1.msra.mxu0 0.0
    %1887 = vmatprep.mubr.f32.mxu0 0.0
    %1888 = vmatmul.mubr.f32.gmra.mrb[0].mxu0 %v1821
    %v1889 = vpop.f32.mrb[0].mxu0
    %v1890 = vadd.f32 0.0, %v1889
    %v1891 = vpop.f32.mrb[0].mxu0
    %1892 = vdwg.mxu0
    %v1894 = vrot.slane %v1890, 6
    %v1896 = vadd.f32 %v1265, %v1894
    %v1897 = vsub.f32 0.0, %v1896
    %v1898 = vmul.f32 %v1897, 1.442695
    %v1899 = vpow.pop %v1898
    %v1900 = vadd.f32 %v1899, 1.0
    %v1901 = vrcp.pop %v1900
    %v1902 = vmul.f32 1.0, %v1901
    %v1903 = vtanh.pop %v1896
    %v1905 = vrot.slane %v1809, 6
    %v1907 = vmul.f32 %v1902, %v1905
    %1909 = vrot.lane.b32.xlu0 %v1903, 64
    %v1910 = vpop.permute.xlu0 %1909
    %v1912 = vmul.f32 %v1902, %v1910
    %1914 = vrot.lane.b32.xlu0 %v1912, 32
    %v1915 = vpop.permute.xlu0 %1914
    %v1917 = vadd.f32 %v1907, %v1915
    %v1918 = vtanh.pop %v1917
    %1920 = vrot.lane.b32.xlu0 %v1918, 64
    %v1921 = vpop.permute.xlu0 %1920
    %v1923 = vmul.f32 %v1902, %v1921
    %1925 = vrot.lane.b32.xlu0 %v1923, 32
    %v1926 = vpop.permute.xlu0 %1925
    %1928 = vst.msk [vmem:[#allocation2 + $0x8] sm:$0xc] %vm494, %v1926
    %v1929 = vrot.slane %v1923, 2
    %1930 = vrot.lane.b32.xlu0 %v1929, 32
    %v1931 = vpop.permute.xlu0 %1930
    %v1932 = vsel %vm274, %v1931, 0
    %1934 = vmatprep.subr.mxu0 0.0
    %1935 = vmatpush1.msra.mxu0 %v1268
    %1936 = vmatprep.subr.mxu0 0.0
    %1937 = vmatpush1.msra.mxu0 %v1269
    %1938 = vmatprep.subr.mxu0 0.0
    %1939 = vmatpush1.msra.mxu0 %v1270
    %1940 = vmatprep.subr.mxu0 0.0
    %1941 = vmatpush1.msra.mxu0 %v1271
    %1942 = vmatprep.subr.mxu0 0.0
    %1943 = vmatpush1.msra.mxu0 0.0
    %1944 = vmatprep.subr.mxu0 0.0
    %1945 = vmatpush1.msra.mxu0 0.0
    %1946 = vmatprep.subr.mxu0 0.0
    %1947 = vmatpush1.msra.mxu0 0.0
    %1948 = vmatprep.subr.mxu0 0.0
    %1949 = vmatpush1.msra.mxu0 0.0
    %1950 = vmatprep.subr.mxu0 0.0
    %1951 = vmatpush1.msra.mxu0 0.0
    %1952 = vmatprep.subr.mxu0 0.0
    %1953 = vmatpush1.msra.mxu0 0.0
    %1954 = vmatprep.subr.mxu0 0.0
    %1955 = vmatpush1.msra.mxu0 0.0
    %1956 = vmatprep.subr.mxu0 0.0
    %1957 = vmatpush1.msra.mxu0 0.0
    %1958 = vmatprep.subr.mxu0 0.0
    %1959 = vmatpush1.msra.mxu0 0.0
    %1960 = vmatprep.subr.mxu0 0.0
    %1961 = vmatpush1.msra.mxu0 0.0
    %1962 = vmatprep.subr.mxu0 0.0
    %1963 = vmatpush1.msra.mxu0 0.0
    %1964 = vmatprep.subr.mxu0 0.0
    %1965 = vmatpush1.msra.mxu0 0.0
    %1966 = vmatprep.subr.mxu0 0.0
    %1967 = vmatpush1.msra.mxu0 0.0
    %1968 = vmatprep.subr.mxu0 0.0
    %1969 = vmatpush1.msra.mxu0 0.0
    %1970 = vmatprep.subr.mxu0 0.0
    %1971 = vmatpush1.msra.mxu0 0.0
    %1972 = vmatprep.subr.mxu0 0.0
    %1973 = vmatpush1.msra.mxu0 0.0
    %1974 = vmatprep.subr.mxu0 0.0
    %1975 = vmatpush1.msra.mxu0 0.0
    %1976 = vmatprep.subr.mxu0 0.0
    %1977 = vmatpush1.msra.mxu0 0.0
    %1978 = vmatprep.subr.mxu0 0.0
    %1979 = vmatpush1.msra.mxu0 0.0
    %1980 = vmatprep.subr.mxu0 0.0
    %1981 = vmatpush1.msra.mxu0 0.0
    %1982 = vmatprep.subr.mxu0 0.0
    %1983 = vmatpush1.msra.mxu0 0.0
    %1984 = vmatprep.subr.mxu0 0.0
    %1985 = vmatpush1.msra.mxu0 0.0
    %1986 = vmatprep.subr.mxu0 0.0
    %1987 = vmatpush1.msra.mxu0 0.0
    %1988 = vmatprep.subr.mxu0 0.0
    %1989 = vmatpush1.msra.mxu0 0.0
    %1990 = vmatprep.subr.mxu0 0.0
    %1991 = vmatpush1.msra.mxu0 0.0
    %1992 = vmatprep.subr.mxu0 0.0
    %1993 = vmatpush1.msra.mxu0 0.0
    %1994 = vmatprep.subr.mxu0 0.0
    %1995 = vmatpush1.msra.mxu0 0.0
    %1996 = vmatprep.subr.mxu0 0.0
    %1997 = vmatpush1.msra.mxu0 0.0
    %1998 = vmatprep.mubr.f32.mxu0 0.0
    %1999 = vmatmul.mubr.f32.gmra.mrb[0].mxu0 %v1932
    %v2000 = vpop.f32.mrb[0].mxu0
    %v2001 = vadd.f32 0.0, %v2000
    %v2002 = vpop.f32.mrb[0].mxu0
    %2003 = vdwg.mxu0
    %v2005 = vrot.slane %v2001, 4
    %v2007 = vadd.f32 %v1265, %v2005
    %v2008 = vsub.f32 0.0, %v2007
    %v2009 = vmul.f32 %v2008, 1.442695
    %v2010 = vpow.pop %v2009
    %v2011 = vadd.f32 %v2010, 1.0
    %v2012 = vrcp.pop %v2011
    %v2013 = vmul.f32 1.0, %v2012
    %v2014 = vtanh.pop %v2007
    %v2016 = vrot.slane %v1917, 6
    %v2018 = vmul.f32 %v2013, %v2016
    %2020 = vrot.lane.b32.xlu0 %v2014, 64
    %v2021 = vpop.permute.xlu0 %2020
    %v2023 = vmul.f32 %v2013, %v2021
    %2025 = vrot.lane.b32.xlu0 %v2023, 32
    %v2026 = vpop.permute.xlu0 %2025
    %v2028 = vadd.f32 %v2018, %v2026
    %v2029 = vtanh.pop %v2028
    %2031 = vrot.lane.b32.xlu0 %v2029, 64
    %v2032 = vpop.permute.xlu0 %2031
    %v2034 = vmul.f32 %v2013, %v2032
    %2036 = vrot.lane.b32.xlu0 %v2034, 32
    %v2037 = vpop.permute.xlu0 %2036
    %2039 = vst.msk [vmem:[#allocation2 + $0x8] sm:$0x30] %vm609, %v2037
    %v2040 = vrot.slane %v2034, 4
    %2041 = vrot.lane.b32.xlu0 %v2040, 32
    %v2042 = vpop.permute.xlu0 %2041
    %v2043 = vsel %vm274, %v2042, 0
    %2045 = vmatprep.subr.mxu0 0.0
    %2046 = vmatpush1.msra.mxu0 %v1268
    %2047 = vmatprep.subr.mxu0 0.0
    %2048 = vmatpush1.msra.mxu0 %v1269
    %2049 = vmatprep.subr.mxu0 0.0
    %2050 = vmatpush1.msra.mxu0 %v1270
    %2051 = vmatprep.subr.mxu0 0.0
    %2052 = vmatpush1.msra.mxu0 %v1271
    %2053 = vmatprep.subr.mxu0 0.0
    %2054 = vmatpush1.msra.mxu0 0.0
    %2055 = vmatprep.subr.mxu0 0.0
    %2056 = vmatpush1.msra.mxu0 0.0
    %2057 = vmatprep.subr.mxu0 0.0
    %2058 = vmatpush1.msra.mxu0 0.0
    %2059 = vmatprep.subr.mxu0 0.0
    %2060 = vmatpush1.msra.mxu0 0.0
    %2061 = vmatprep.subr.mxu0 0.0
    %2062 = vmatpush1.msra.mxu0 0.0
    %2063 = vmatprep.subr.mxu0 0.0
    %2064 = vmatpush1.msra.mxu0 0.0
    %2065 = vmatprep.subr.mxu0 0.0
    %2066 = vmatpush1.msra.mxu0 0.0
    %2067 = vmatprep.subr.mxu0 0.0
    %2068 = vmatpush1.msra.mxu0 0.0
    %2069 = vmatprep.subr.mxu0 0.0
    %2070 = vmatpush1.msra.mxu0 0.0
    %2071 = vmatprep.subr.mxu0 0.0
    %2072 = vmatpush1.msra.mxu0 0.0
    %2073 = vmatprep.subr.mxu0 0.0
    %2074 = vmatpush1.msra.mxu0 0.0
    %2075 = vmatprep.subr.mxu0 0.0
    %2076 = vmatpush1.msra.mxu0 0.0
    %2077 = vmatprep.subr.mxu0 0.0
    %2078 = vmatpush1.msra.mxu0 0.0
    %2079 = vmatprep.subr.mxu0 0.0
    %2080 = vmatpush1.msra.mxu0 0.0
    %2081 = vmatprep.subr.mxu0 0.0
    %2082 = vmatpush1.msra.mxu0 0.0
    %2083 = vmatprep.subr.mxu0 0.0
    %2084 = vmatpush1.msra.mxu0 0.0
    %2085 = vmatprep.subr.mxu0 0.0
    %2086 = vmatpush1.msra.mxu0 0.0
    %2087 = vmatprep.subr.mxu0 0.0
    %2088 = vmatpush1.msra.mxu0 0.0
    %2089 = vmatprep.subr.mxu0 0.0
    %2090 = vmatpush1.msra.mxu0 0.0
    %2091 = vmatprep.subr.mxu0 0.0
    %2092 = vmatpush1.msra.mxu0 0.0
    %2093 = vmatprep.subr.mxu0 0.0
    %2094 = vmatpush1.msra.mxu0 0.0
    %2095 = vmatprep.subr.mxu0 0.0
    %2096 = vmatpush1.msra.mxu0 0.0
    %2097 = vmatprep.subr.mxu0 0.0
    %2098 = vmatpush1.msra.mxu0 0.0
    %2099 = vmatprep.subr.mxu0 0.0
    %2100 = vmatpush1.msra.mxu0 0.0
    %2101 = vmatprep.subr.mxu0 0.0
    %2102 = vmatpush1.msra.mxu0 0.0
    %2103 = vmatprep.subr.mxu0 0.0
    %2104 = vmatpush1.msra.mxu0 0.0
    %2105 = vmatprep.subr.mxu0 0.0
    %2106 = vmatpush1.msra.mxu0 0.0
    %2107 = vmatprep.subr.mxu0 0.0
    %2108 = vmatpush1.msra.mxu0 0.0
    %2109 = vmatprep.mubr.f32.mxu0 0.0
    %2110 = vmatmul.mubr.f32.gmra.mrb[0].mxu0 %v2043
    %v2111 = vpop.f32.mrb[0].mxu0
    %v2112 = vadd.f32 0.0, %v2111
    %v2113 = vpop.f32.mrb[0].mxu0
    %2114 = vdwg.mxu0
    %v2116 = vrot.slane %v2112, 2
    %v2118 = vadd.f32 %v1265, %v2116
    %v2119 = vsub.f32 0.0, %v2118
    %v2120 = vmul.f32 %v2119, 1.442695
    %v2121 = vpow.pop %v2120
    %v2122 = vadd.f32 %v2121, 1.0
    %v2123 = vrcp.pop %v2122
    %v2124 = vmul.f32 1.0, %v2123
    %v2125 = vtanh.pop %v2118
    %v2127 = vrot.slane %v2028, 6
    %v2129 = vmul.f32 %v2124, %v2127
    %2131 = vrot.lane.b32.xlu0 %v2125, 64
    %v2132 = vpop.permute.xlu0 %2131
    %v2134 = vmul.f32 %v2124, %v2132
    %2136 = vrot.lane.b32.xlu0 %v2134, 32
    %v2137 = vpop.permute.xlu0 %2136
    %v2139 = vadd.f32 %v2129, %v2137
    %v2140 = vtanh.pop %v2139
    %2142 = vrot.lane.b32.xlu0 %v2140, 64
    %v2143 = vpop.permute.xlu0 %2142
    %v2145 = vmul.f32 %v2124, %v2143
    %2147 = vrot.lane.b32.xlu0 %v2145, 32
    %v2148 = vpop.permute.xlu0 %2147
    %2150 = vst.msk [vmem:[#allocation2 + $0x8] sm:$0xc0] %vm724, %v2148
    %s2151 = scalar_lea.vmem [#allocation11], 2
    %2152 = vst.msk [vmem:[%s2151 - $0x6] sm:$0xc0] %vm724, %v2148
    %2154 = vrot.lane.b32.xlu0 %v2139, 96
    %v2155 = vpop.permute.xlu0 %2154
    %s2157 = scalar_lea.vmem [#allocation12], 2
    %2158 = vst.msk [vmem:[%s2157 - $0x6] sm:$0xc0] %vm724, %v2155
    %v2159 = vld [vmem:[#allocation2] sm:$0xff]
    %v2160 = vld [vmem:[#allocation2 + $0x8] sm:$0xff]
    %v2161 = vld [vmem:[#allocation8] sm:$0xff]
    %v2162 = vld [vmem:[#allocation8 + $0x8] sm:$0xff]
    %v2163 = vld [vmem:[#allocation8 + $0x10] sm:$0xff]
    %v2164 = vld [vmem:[#allocation8 + $0x18] sm:$0xff]
    %v2165 = vld [vmem:[#allocation9] sm:$0x1]
    %v2167 = vlaneseq
    %v2168 = vshrl.u32 %v2167, 7
    %v2169 = vsub.s32 0, %v2168
    %v2170 = vrot.slane %v2165, %v2169
    %v2173 = vsel %vm274, %v2159, 0
    %v2176 = vsel %vm274, %v2160, 0
    %2178 = vmatprep.subr.mxu0 0.0
    %2179 = vmatpush1.msra.mxu0 %v2161
    %2180 = vmatprep.subr.mxu0 0.0
    %2181 = vmatpush1.msra.mxu0 %v2162
    %2182 = vmatprep.subr.mxu0 0.0
    %2183 = vmatpush1.msra.mxu0 %v2163
    %2184 = vmatprep.subr.mxu0 0.0
    %2185 = vmatpush1.msra.mxu0 %v2164
    %2186 = vmatprep.subr.mxu0 0.0
    %2187 = vmatpush1.msra.mxu0 0.0
    %2188 = vmatprep.subr.mxu0 0.0
    %2189 = vmatpush1.msra.mxu0 0.0
    %2190 = vmatprep.subr.mxu0 0.0
    %2191 = vmatpush1.msra.mxu0 0.0
    %2192 = vmatprep.subr.mxu0 0.0
    %2193 = vmatpush1.msra.mxu0 0.0
    %2194 = vmatprep.subr.mxu0 0.0
    %2195 = vmatpush1.msra.mxu0 0.0
    %2196 = vmatprep.subr.mxu0 0.0
    %2197 = vmatpush1.msra.mxu0 0.0
    %2198 = vmatprep.subr.mxu0 0.0
    %2199 = vmatpush1.msra.mxu0 0.0
    %2200 = vmatprep.subr.mxu0 0.0
    %2201 = vmatpush1.msra.mxu0 0.0
    %2202 = vmatprep.subr.mxu0 0.0
    %2203 = vmatpush1.msra.mxu0 0.0
    %2204 = vmatprep.subr.mxu0 0.0
    %2205 = vmatpush1.msra.mxu0 0.0
    %2206 = vmatprep.subr.mxu0 0.0
    %2207 = vmatpush1.msra.mxu0 0.0
    %2208 = vmatprep.subr.mxu0 0.0
    %2209 = vmatpush1.msra.mxu0 0.0
    %2210 = vmatprep.subr.mxu0 0.0
    %2211 = vmatpush1.msra.mxu0 0.0
    %2212 = vmatprep.subr.mxu0 0.0
    %2213 = vmatpush1.msra.mxu0 0.0
    %2214 = vmatprep.subr.mxu0 0.0
    %2215 = vmatpush1.msra.mxu0 0.0
    %2216 = vmatprep.subr.mxu0 0.0
    %2217 = vmatpush1.msra.mxu0 0.0
    %2218 = vmatprep.subr.mxu0 0.0
    %2219 = vmatpush1.msra.mxu0 0.0
    %2220 = vmatprep.subr.mxu0 0.0
    %2221 = vmatpush1.msra.mxu0 0.0
    %2222 = vmatprep.subr.mxu0 0.0
    %2223 = vmatpush1.msra.mxu0 0.0
    %2224 = vmatprep.subr.mxu0 0.0
    %2225 = vmatpush1.msra.mxu0 0.0
    %2226 = vmatprep.subr.mxu0 0.0
    %2227 = vmatpush1.msra.mxu0 0.0
    %2228 = vmatprep.subr.mxu0 0.0
    %2229 = vmatpush1.msra.mxu0 0.0
    %2230 = vmatprep.subr.mxu0 0.0
    %2231 = vmatpush1.msra.mxu0 0.0
    %2232 = vmatprep.subr.mxu0 0.0
    %2233 = vmatpush1.msra.mxu0 0.0
    %2234 = vmatprep.subr.mxu0 0.0
    %2235 = vmatpush1.msra.mxu0 0.0
    %2236 = vmatprep.subr.mxu0 0.0
    %2237 = vmatpush1.msra.mxu0 0.0
    %2238 = vmatprep.subr.mxu0 0.0
    %2239 = vmatpush1.msra.mxu0 0.0
    %2240 = vmatprep.subr.mxu0 0.0
    %2241 = vmatpush1.msra.mxu0 0.0
    %2242 = vmatprep.mubr.f32.mxu0 0.0
    %2243 = vmatmul.mubr.f32.gmra.mrb[0].mxu0 %v2173
    %v2244 = vpop.f32.mrb[0].mxu0
    %v2245 = vadd.f32 %v2170, %v2244
    %v2246 = vpop.f32.mrb[0].mxu0
    %2247 = vmatprep.mubr.f32.mxu0 0.0
    %2248 = vmatmul.mubr.f32.gmra.mrb[0].mxu0 %v2176
    %v2249 = vpop.f32.mrb[0].mxu0
    %v2250 = vadd.f32 %v2170, %v2249
    %v2251 = vpop.f32.mrb[0].mxu0
    %2252 = vdwg.mxu0
    %2253 = vst [vmem:[%s13] sm:$0xff] %v2245
    %2254 = vst [vmem:[%s13 + $0x8] sm:$0xff] %v2250
    // Predicated region
    $region70: #{decoder_forward.1} parent=1 // pred_check
      _
    $region71: #{decoder_forward.1} parent=1 // pred_check_branch
      %2256 = sbr.rel (0) target = $region73
    $region72: #{decoder_forward.1} parent=1 // pred_region
      _
    $region73: #{decoder_forward.1} parent=1 // pred_fallthru
      _
    // Predicated region
    $region74: #{decoder_forward.1} parent=1 // pred_check
      _
    $region75: #{decoder_forward.1} parent=1 // pred_check_branch
      %2258 = sbr.rel (0) target = $region77
    $region76: #{decoder_forward.1} parent=1 // pred_region
      %s2260 = ssub.s32 64, 64
      %2261 = vsyncadd [#allocation5], %s2260
      %s2262 = sshll.u32 [#allocation11], 4
      %s2263 = int_to_ptr.vmem [resolvable:$true] %s2262
      %2268 = dma.vmem_to_hbm [thread:$0]  %s2263, 64, %s14, [#allocation5], 32, 32, 2
    $region77: #{decoder_forward.1} parent=1 // pred_fallthru
      _
    // Predicated region
    $region78: #{decoder_forward.1} parent=1 // pred_check
      _
    $region79: #{decoder_forward.1} parent=1 // pred_check_branch
      %2270 = sbr.rel (0) target = $region81
    $region80: #{decoder_forward.1} parent=1 // pred_region
      %s2272 = ssub.s32 64, 64
      %2273 = vsyncadd [#allocation13], %s2272
      %s2274 = sshll.u32 [#allocation12], 4
      %s2275 = int_to_ptr.vmem [resolvable:$true] %s2274
      %2280 = dma.vmem_to_hbm [thread:$0]  %s2275, 64, %s15, [#allocation13], 32, 32, 2
    $region81: #{decoder_forward.1} parent=1 // pred_fallthru
      _
    // Predicated region
    $region82: #{decoder_forward.1} parent=1 // pred_check
      _
    $region83: #{decoder_forward.1} parent=1 // pred_check_branch
      %2282 = sbr.rel (0) target = $region85
    $region84: #{decoder_forward.1} parent=1 // pred_region
      _
    $region85: #{decoder_forward.1} parent=1 // pred_fallthru
      _
    // Predicated region
    $region86: #{decoder_forward.1} parent=1 // pred_check
      _
    $region87: #{decoder_forward.1} parent=1 // pred_check_branch
      %2284 = sbr.rel (0) target = $region89
    $region88: #{decoder_forward.1} parent=1 // pred_region
      %2285 = dma.done [#allocation5], 64
    $region89: #{decoder_forward.1} parent=1 // pred_fallthru
      _
    // Predicated region
    $region90: #{decoder_forward.1} parent=1 // pred_check
      _
    $region91: #{decoder_forward.1} parent=1 // pred_check_branch
      %2287 = sbr.rel (0) target = $region93
    $region92: #{decoder_forward.1} parent=1 // pred_region
      %2288 = dma.done [#allocation13], 64
    $region93: #{decoder_forward.1} parent=1 // pred_fallthru
      _
    %2289 = vsyncpa [#allocation4], 1
    %2290 = vsyncpa [#allocation7], 1
    %2291 = vsyncpa [#allocation10], 1
    %2292 = vsyncpa [#allocation5], 1
    %2293 = vsyncpa [#allocation13], 1

</llo_original>
